<compile_context>
chip_gen: v7x
topology: tpu7x:2x2x1
jax: 0.10.0
libtpu: 0.0.40
codegen_flags: <defaults>
</compile_context>

<pallas_src>
import functools
import math

import jax
import jax.numpy as jnp
from jax.experimental import pallas as pl
from jax.experimental.pallas import tpu as pltpu


# ----------------------------- Pallas kernel --------------------------------
def _isab_kernel(x_ref, q0_ref,
                 wkv0_ref, bkv0_ref, wo0_ref, bo0_ref,
                 wq1_ref, bq1_ref, wkv1_ref, bkv1_ref, wo1_ref, bo1_ref,
                 o_ref, *, num_heads, compute_dtype):
    """Fused ISAB forward for one batch tile.  Grid axis 0 = batch tiles."""
    BB, N, dI = x_ref.shape
    M, dV = q0_ref.shape
    nh = num_heads
    ds = dV // nh
    f32 = jnp.float32
    cdt = compute_dtype

    def mm(a, w_ref):
        # MXU matmul: operands in the compute dtype (bf16 by default — bf16 is
        # MXU-native on v5e/v6e/v7x), accumulation in f32.
        return jnp.dot(a.astype(cdt), w_ref[...], preferred_element_type=f32)

    def split_heads(t3d):
        # (BB, S, dV) -> (nh*BB, S, ds): heads moved onto the leading batch axis
        # so all heads run in ONE batched einsum / softmax.
        return jnp.concatenate(
            [t3d[:, :, h * ds:(h + 1) * ds] for h in range(nh)], axis=0)

    def merge_heads(t3d):
        # (nh*BB, S, ds) -> (BB, S, dV): one full-width lane-axis concatenation.
        return jnp.concatenate(
            [t3d[h * BB:(h + 1) * BB] for h in range(nh)], axis=-1)

    def attention(qh, kh, vh):
        # qh: (nh*BB, Sq, ds) f32; kh/vh: (nh*BB, Sk, ds) f32.  kh is pre-scaled
        # by 1/sqrt(dim_V) (folded into the K weights in the wrapper).
        # Softmax math stays in f32 (v5e has no bf16 VPU/EUP).
        s = jnp.einsum("bqd,bkd->bqk", qh.astype(cdt), kh.astype(cdt),
                       preferred_element_type=f32)
        s = s - jnp.max(s, axis=-1, keepdims=True)
        e = jnp.exp(s)
        inv = pl.reciprocal(jnp.sum(e, axis=-1, keepdims=True), approx=True)
        a = (e * inv).astype(cdt)
        return qh + jnp.einsum("bqk,bkd->bqd", a, vh.astype(cdt),
                               preferred_element_type=f32)

    Xf = x_ref[...].reshape(BB * N, dI)

    # -------- MAB0: Q = proj(I) (precomputed in the wrapper), K/V from X -------
    kv0 = mm(Xf, wkv0_ref) + bkv0_ref[...]               # (BB*N, 2*dV), f32
    k0h = split_heads(kv0[:, :dV].reshape(BB, N, dV))
    v0h = split_heads(kv0[:, dV:].reshape(BB, N, dV))
    q0 = q0_ref[...]                                     # (M, dV), batch-shared
    q0h = jnp.concatenate(
        [jnp.broadcast_to(q0[None, :, h * ds:(h + 1) * ds], (BB, M, ds))
         for h in range(nh)], axis=0)                    # (nh*BB, M, ds)
    H = merge_heads(attention(q0h, k0h, v0h))            # (BB, M, dV), f32
    Hf = H.reshape(BB * M, dV)
    Hf = Hf + jnp.maximum(mm(Hf, wo0_ref) + bo0_ref[...], 0.0)

    # -------- MAB1: Q from X, K/V from H (H never leaves VMEM / vregs) ---------
    q1 = mm(Xf, wq1_ref) + bq1_ref[...]                  # (BB*N, dV), f32
    kv1 = mm(Hf, wkv1_ref) + bkv1_ref[...]               # (BB*M, 2*dV), f32
    q1h = split_heads(q1.reshape(BB, N, dV))
    k1h = split_heads(kv1[:, :dV].reshape(BB, M, dV))
    v1h = split_heads(kv1[:, dV:].reshape(BB, M, dV))
    O = merge_heads(attention(q1h, k1h, v1h))            # (BB, N, dV), f32
    Of = O.reshape(BB * N, dV)
    Of = Of + jnp.maximum(mm(Of, wo1_ref) + bo1_ref[...], 0.0)

    # Single store of the finished tile (no per-head writes, no o_ref round trip).
    o_ref[...] = Of.reshape(BB, N, dV).astype(o_ref.dtype)


# ------------------------------ wrapper --------------------------------------
def _pick_batch_block(B, N, M, dI, dV, num_heads, budget_bytes):
    """Largest batch tile with >= 2 grid steps (megacore + pipelining) that fits
    the per-step VMEM budget."""
    def footprint(BB):
        f32b = 4
        stream = 2 * BB * (N * dI + N * dV) * f32b           # double-buffered X/out
        act = BB * (4 * N * dV + 4 * M * dV) * f32b          # kv/q/H/O intermediates
        scores = 3 * num_heads * BB * M * N * f32b           # s / e / a temporaries
        return stream + act + scores

    best = 1
    for bb in range(1, B + 1):
        if B % bb:
            continue
        if (B // bb >= 2 or B == 1) and footprint(bb) <= budget_bytes:
            best = max(best, bb)
    return best


def isab_forward(X, params, num_heads, batch_block=None,
                 compute_dtype=jnp.bfloat16):
    """ISAB forward: H = MAB0(I, X); out = MAB1(X, H), fused in one pallas_call."""
    B, N, dI = X.shape
    I2 = params["I"][0]                          # (num_inds, dim_out)
    M, dV = I2.shape
    assert dV % num_heads == 0, "dim_V must be divisible by num_heads"
    p0, p1 = params["mab0"], params["mab1"]
    f32 = jnp.float32
    cdt = compute_dtype
    scale = 1.0 / math.sqrt(dV)

    # Batch-invariant query projection of the inducing points: hoisted out of the
    # grid loop (it was previously recomputed every grid step).
    q0 = (I2 @ p0["wq"] + p0["bq"]).astype(f32)                      # (M, dV)

    # Fused K/V projections (one MXU push, 2*dV output lanes); fold 1/sqrt(dim_V)
    # into the K half (K only feeds the scores).  Weights cast once to the
    # compute dtype; biases stay f32 (added to f32 accumulators).
    wkv0 = jnp.concatenate([p0["wk"] * scale, p0["wv"]], axis=1).astype(cdt)
    bkv0 = jnp.concatenate([p0["bk"] * scale, p0["bv"]], axis=1).astype(f32)
    wkv1 = jnp.concatenate([p1["wk"] * scale, p1["wv"]], axis=1).astype(cdt)
    bkv1 = jnp.concatenate([p1["bk"] * scale, p1["bv"]], axis=1).astype(f32)
    wo0, bo0 = p0["wo"].astype(cdt), p0["bo"].astype(f32)
    wq1, bq1 = p1["wq"].astype(cdt), p1["bq"].astype(f32)
    wo1, bo1 = p1["wo"].astype(cdt), p1["bo"].astype(f32)

    # Per-generation VMEM sizing: ~0.8 * physical (v5e/v6e 128 MiB, v7x 64 MiB),
    # capped; v7x-safe fallback if the hardware query is unavailable.
    try:
        vmem_cap = int(getattr(pltpu.get_tpu_info(), "vmem_capacity_bytes", 0))
    except Exception:
        vmem_cap = 0
    if vmem_cap <= 0:
        vmem_cap = 64 * 1024 * 1024
    vmem_limit = min(int(vmem_cap * 0.8), 100 * 1024 * 1024)

    if batch_block is None:
        BB = _pick_batch_block(B, N, M, dI, dV, num_heads, vmem_limit // 2)
    else:
        BB = batch_block
    assert B % BB == 0, "batch_block must divide the batch size"
    grid = (B // BB,)

    kernel = functools.partial(_isab_kernel, num_heads=num_heads,
                               compute_dtype=cdt)

    def w(arr):
        # Weight / bias / q0: constant block index -> stays resident in VMEM.
        return pl.BlockSpec(arr.shape, lambda b: (0,) * arr.ndim)

    in_specs = [pl.BlockSpec((BB, N, dI), lambda b: (b, 0, 0))] + [
        w(a) for a in (q0, wkv0, bkv0, wo0, bo0, wq1, bq1, wkv1, bkv1, wo1, bo1)]
    out_spec = pl.BlockSpec((BB, N, dV), lambda b: (b, 0, 0))

    nh = num_heads
    flops = int(2 * (B * N * dI * 2 * dV + B * M * dV * dV + B * N * dI * dV
                     + B * M * dV * 2 * dV + B * N * dV * dV)
                + 8 * B * M * N * dV)
    transcendentals = int(2 * B * nh * M * N + 2 * B * nh * (M + N))
    bytes_accessed = int(4 * (X.size + B * N * dV + q0.size)
                         + 2 * sum(int(a.size) for a in (wkv0, wo0, wq1, wkv1, wo1))
                         + 4 * sum(int(a.size) for a in (bkv0, bo0, bq1, bkv1, bo1)))
    cost = pl.CostEstimate(flops=flops, transcendentals=transcendentals,
                           bytes_accessed=bytes_accessed)

    return pl.pallas_call(
        kernel,
        out_shape=jax.ShapeDtypeStruct((B, N, dV), jnp.float32),
        grid_spec=pltpu.PrefetchScalarGridSpec(
            num_scalar_prefetch=0,
            grid=grid,
            in_specs=in_specs,
            out_specs=out_spec),
        compiler_params=pltpu.CompilerParams(
            dimension_semantics=("parallel",),
            vmem_limit_bytes=vmem_limit),
        cost_estimate=cost,
    )(X, q0, wkv0, bkv0, wo0, bo0, wq1, bq1, wkv1, bkv1, wo1, bo1)


# ------------------------- parameter initialization --------------------------
def _init_linear(key, d_in, d_out):
    kw, kb = jax.random.split(key)
    bound = 1.0 / math.sqrt(d_in)
    w = jax.random.uniform(kw, (d_in, d_out), jnp.float32, -bound, bound)
    b = jax.random.uniform(kb, (1, d_out), jnp.float32, -bound, bound)
    return w, b


def _init_mab(key, dim_Q, dim_K, dim_V):
    ks = jax.random.split(key, 4)
    wq, bq = _init_linear(ks[0], dim_Q, dim_V)
    wk, bk = _init_linear(ks[1], dim_K, dim_V)
    wv, bv = _init_linear(ks[2], dim_K, dim_V)
    wo, bo = _init_linear(ks[3], dim_V, dim_V)
    return dict(wq=wq, bq=bq, wk=wk, bk=bk, wv=wv, bv=bv, wo=wo, bo=bo)


def init_isab(key, dim_in, dim_out, num_inds):
    k_i, k0, k1 = jax.random.split(key, 3)
    bound = math.sqrt(6.0 / (num_inds + dim_out))     # xavier_uniform on I
    I = jax.random.uniform(k_i, (1, num_inds, dim_out), jnp.float32, -bound, bound)
    return dict(
        I=I,
        mab0=_init_mab(k0, dim_out, dim_in, dim_out),
        mab1=_init_mab(k1, dim_in, dim_out, dim_out),
    )


# ----------------------------- pure-JAX reference ----------------------------
def _mab_ref(Q_in, K_in, p, num_heads):
    dV = p["wq"].shape[1]
    ds = dV // num_heads
    q = Q_in @ p["wq"] + p["bq"][0]
    k = K_in @ p["wk"] + p["bk"][0]
    v = K_in @ p["wv"] + p["bv"][0]
    B, Sq, _ = q.shape
    qh = q.reshape(B, Sq, num_heads, ds).transpose(0, 2, 1, 3)
    kh = k.reshape(B, -1, num_heads, ds).transpose(0, 2, 1, 3)
    vh = v.reshape(B, -1, num_heads, ds).transpose(0, 2, 1, 3)
    s = jnp.einsum("bhqd,bhkd->bhqk", qh, kh) / math.sqrt(dV)
    a = jax.nn.softmax(s, axis=-1)
    oh = qh + jnp.einsum("bhqk,bhkd->bhqd", a, vh)
    O = oh.transpose(0, 2, 1, 3).reshape(B, Sq, dV)
    return O + jax.nn.relu(O @ p["wo"] + p["bo"][0])


def _isab_ref(X, params, num_heads):
    B = X.shape[0]
    I_rep = jnp.broadcast_to(params["I"], (B,) + params["I"].shape[1:])
    H = _mab_ref(I_rep, X, params["mab0"], num_heads)
    return _mab_ref(X, H, params["mab1"], num_heads)


# ------------------------------------ main -----------------------------------
if __name__ == "__main__":
    B, N = 2, 16           # batch, set size
    dim_in, dim_out = 8, 32
    num_heads, num_inds = 4, 8

    key = jax.random.PRNGKey(0)
    kx, kp = jax.random.split(key)
    X = jax.random.normal(kx, (B, N, dim_in), jnp.float32)
    params = init_isab(kp, dim_in, dim_out, num_inds)

    ref = _isab_ref(X, params, num_heads)

    # Exact-precision path (f32 MXU operands): tight check vs the JAX reference.
    # Tolerance 3e-3: the softmax uses the EUP approximate reciprocal.
    out_f32 = jax.block_until_ready(
        isab_forward(X, params, num_heads, compute_dtype=jnp.float32))
    assert out_f32.shape == (B, N, dim_out)
    assert jnp.allclose(out_f32, ref, atol=3e-3, rtol=3e-3), "f32 mismatch vs ref"

    # Default mixed-precision path (bf16 MXU operands, f32 accumulation):
    # bf16 operand rounding over the stacked matmuls gives ~1-2% error vs f32.
    out = jax.block_until_ready(isab_forward(X, params, num_heads))
    assert out.shape == (B, N, dim_out)
    assert jnp.allclose(out, ref, atol=5e-2, rtol=5e-2), "bf16 mismatch vs ref"

    print("KERNEL_OK")
</pallas_src>

<mosaic_0001>
module attributes {stable_mosaic.version = 11 : i64} {
  func.func @_isab_kernel(%arg0: i32, %arg1: memref<1x16x8xf32, #tpu.memory_space<vmem>>, %arg2: memref<8x32xf32, #tpu.memory_space<vmem>>, %arg3: memref<8x64xf32, #tpu.memory_space<vmem>>, %arg4: memref<1x64xf32, #tpu.memory_space<vmem>>, %arg5: memref<32x32xf32, #tpu.memory_space<vmem>>, %arg6: memref<1x32xf32, #tpu.memory_space<vmem>>, %arg7: memref<8x32xf32, #tpu.memory_space<vmem>>, %arg8: memref<1x32xf32, #tpu.memory_space<vmem>>, %arg9: memref<32x64xf32, #tpu.memory_space<vmem>>, %arg10: memref<1x64xf32, #tpu.memory_space<vmem>>, %arg11: memref<32x32xf32, #tpu.memory_space<vmem>>, %arg12: memref<1x32xf32, #tpu.memory_space<vmem>>, %arg13: memref<1x16x32xf32, #tpu.memory_space<vmem>>) attributes {dimension_semantics = [#tpu.dimension_semantics<parallel>], iteration_bounds = array<i64: 2>, scalar_prefetch = 0 : i64, scratch_operands = 0 : i64, tpu.core_type = #tpu.core_type<tc>, window_params = [{transform_indices = @transform_0, window_bounds = array<i64: 1, 16, 8>}, {pipeline_mode = #tpu.pipeline_mode<synchronous>, transform_indices = @transform_1, window_bounds = array<i64: 8, 32>}, {pipeline_mode = #tpu.pipeline_mode<synchronous>, transform_indices = @transform_2, window_bounds = array<i64: 8, 64>}, {pipeline_mode = #tpu.pipeline_mode<synchronous>, transform_indices = @transform_3, window_bounds = array<i64: 1, 64>}, {pipeline_mode = #tpu.pipeline_mode<synchronous>, transform_indices = @transform_4, window_bounds = array<i64: 32, 32>}, {pipeline_mode = #tpu.pipeline_mode<synchronous>, transform_indices = @transform_5, window_bounds = array<i64: 1, 32>}, {pipeline_mode = #tpu.pipeline_mode<synchronous>, transform_indices = @transform_6, window_bounds = array<i64: 8, 32>}, {pipeline_mode = #tpu.pipeline_mode<synchronous>, transform_indices = @transform_7, window_bounds = array<i64: 1, 32>}, {pipeline_mode = #tpu.pipeline_mode<synchronous>, transform_indices = @transform_8, window_bounds = array<i64: 32, 64>}, {pipeline_mode = #tpu.pipeline_mode<synchronous>, transform_indices = @transform_9, window_bounds = array<i64: 1, 64>}, {pipeline_mode = #tpu.pipeline_mode<synchronous>, transform_indices = @transform_10, window_bounds = array<i64: 32, 32>}, {pipeline_mode = #tpu.pipeline_mode<synchronous>, transform_indices = @transform_11, window_bounds = array<i64: 1, 32>}, {transform_indices = @transform_12, window_bounds = array<i64: 1, 16, 32>}]} {
    %c0 = arith.constant 0 : index
    %c0_0 = arith.constant 0 : index
    %c0_1 = arith.constant 0 : index
    %0 = vector.load %arg1[%c0, %c0_0, %c0_1] : memref<1x16x8xf32, #tpu.memory_space<vmem>>, vector<1x16x8xf32>
    %1 = vector.shape_cast %0 : vector<1x16x8xf32> to vector<16x8xf32>
    %c0_2 = arith.constant 0 : index
    %c0_3 = arith.constant 0 : index
    %2 = vector.load %arg3[%c0_2, %c0_3] : memref<8x64xf32, #tpu.memory_space<vmem>>, vector<8x64xf32>
    %cst = arith.constant dense<0.000000e+00> : vector<16x64xf32>
    %3 = tpu.matmul %1, %2, %cst {dimension_numbers = #tpu.dot_dimension_numbers<[1], [0], [0], [1], [0, 0, 1, 1], [], []>} : vector<16x8xf32>, vector<8x64xf32>, vector<16x64xf32> -> vector<16x64xf32>
    %c0_4 = arith.constant 0 : index
    %c0_5 = arith.constant 0 : index
    %4 = vector.load %arg4[%c0_4, %c0_5] : memref<1x64xf32, #tpu.memory_space<vmem>>, vector<1x64xf32>
    %5 = vector.broadcast %4 : vector<1x64xf32> to vector<16x64xf32>
    %6 = arith.addf %3, %5 : vector<16x64xf32>
    %7 = vector.extract_strided_slice %6 {offsets = [0, 0], sizes = [16, 32], strides = [1, 1]} : vector<16x64xf32> to vector<16x32xf32>
    %8 = vector.shape_cast %7 : vector<16x32xf32> to vector<1x16x32xf32>
    %9 = vector.extract_strided_slice %8 {offsets = [0, 0, 0], sizes = [1, 16, 8], strides = [1, 1, 1]} : vector<1x16x32xf32> to vector<1x16x8xf32>
    %10 = vector.extract_strided_slice %8 {offsets = [0, 0, 8], sizes = [1, 16, 8], strides = [1, 1, 1]} : vector<1x16x32xf32> to vector<1x16x8xf32>
    %11 = vector.extract_strided_slice %8 {offsets = [0, 0, 16], sizes = [1, 16, 8], strides = [1, 1, 1]} : vector<1x16x32xf32> to vector<1x16x8xf32>
    %12 = vector.extract_strided_slice %8 {offsets = [0, 0, 24], sizes = [1, 16, 8], strides = [1, 1, 1]} : vector<1x16x32xf32> to vector<1x16x8xf32>
    %13 = tpu.concatenate %9, %10, %11, %12 in 0 : vector<1x16x8xf32>, vector<1x16x8xf32>, vector<1x16x8xf32>, vector<1x16x8xf32> -> vector<4x16x8xf32>
    %14 = vector.extract_strided_slice %6 {offsets = [0, 32], sizes = [16, 32], strides = [1, 1]} : vector<16x64xf32> to vector<16x32xf32>
    %15 = vector.shape_cast %14 : vector<16x32xf32> to vector<1x16x32xf32>
    %16 = vector.extract_strided_slice %15 {offsets = [0, 0, 0], sizes = [1, 16, 8], strides = [1, 1, 1]} : vector<1x16x32xf32> to vector<1x16x8xf32>
    %17 = vector.extract_strided_slice %15 {offsets = [0, 0, 8], sizes = [1, 16, 8], strides = [1, 1, 1]} : vector<1x16x32xf32> to vector<1x16x8xf32>
    %18 = vector.extract_strided_slice %15 {offsets = [0, 0, 16], sizes = [1, 16, 8], strides = [1, 1, 1]} : vector<1x16x32xf32> to vector<1x16x8xf32>
    %19 = vector.extract_strided_slice %15 {offsets = [0, 0, 24], sizes = [1, 16, 8], strides = [1, 1, 1]} : vector<1x16x32xf32> to vector<1x16x8xf32>
    %20 = tpu.concatenate %16, %17, %18, %19 in 0 : vector<1x16x8xf32>, vector<1x16x8xf32>, vector<1x16x8xf32>, vector<1x16x8xf32> -> vector<4x16x8xf32>
    %c0_6 = arith.constant 0 : index
    %c0_7 = arith.constant 0 : index
    %21 = vector.load %arg2[%c0_6, %c0_7] : memref<8x32xf32, #tpu.memory_space<vmem>>, vector<8x32xf32>
    %22 = vector.extract_strided_slice %21 {offsets = [0, 0], sizes = [8, 8], strides = [1, 1]} : vector<8x32xf32> to vector<8x8xf32>
    %23 = vector.shape_cast %22 : vector<8x8xf32> to vector<1x8x8xf32>
    %24 = vector.extract_strided_slice %21 {offsets = [0, 8], sizes = [8, 8], strides = [1, 1]} : vector<8x32xf32> to vector<8x8xf32>
    %25 = vector.shape_cast %24 : vector<8x8xf32> to vector<1x8x8xf32>
    %26 = vector.extract_strided_slice %21 {offsets = [0, 16], sizes = [8, 8], strides = [1, 1]} : vector<8x32xf32> to vector<8x8xf32>
    %27 = vector.shape_cast %26 : vector<8x8xf32> to vector<1x8x8xf32>
    %28 = vector.extract_strided_slice %21 {offsets = [0, 24], sizes = [8, 8], strides = [1, 1]} : vector<8x32xf32> to vector<8x8xf32>
    %29 = vector.shape_cast %28 : vector<8x8xf32> to vector<1x8x8xf32>
    %30 = tpu.concatenate %23, %25, %27, %29 in 0 : vector<1x8x8xf32>, vector<1x8x8xf32>, vector<1x8x8xf32>, vector<1x8x8xf32> -> vector<4x8x8xf32>
    "tpu.trace_start"() <{level = 10 : i32, message = "bqd,bkd->bqk"}> : () -> ()
    %cst_8 = arith.constant dense<0.000000e+00> : vector<4x8x16xf32>
    %31 = tpu.matmul %30, %13, %cst_8 {dimension_numbers = #tpu.dot_dimension_numbers<[2], [2], [1], [1], [0, 0, 0, 1, 1, 1], [0], [0]>} : vector<4x8x8xf32>, vector<4x16x8xf32>, vector<4x8x16xf32> -> vector<4x8x16xf32>
    "tpu.trace_stop"() : () -> ()
    %cst_9 = arith.constant dense<0xFF800000> : vector<4x8xf32>
    %32 = vector.multi_reduction <maximumf>, %31, %cst_9 [2] : vector<4x8x16xf32> to vector<4x8xf32>
    %33 = vector.shape_cast %32 : vector<4x8xf32> to vector<4x8x1xf32>
    %34 = vector.broadcast %33 : vector<4x8x1xf32> to vector<4x8x16xf32>
    %35 = arith.subf %31, %34 : vector<4x8x16xf32>
    %36 = math.exp %35 : vector<4x8x16xf32>
    %cst_10 = arith.constant dense<0.000000e+00> : vector<4x8xf32>
    %37 = vector.multi_reduction <add>, %36, %cst_10 [2] : vector<4x8x16xf32> to vector<4x8xf32>
    %38 = vector.shape_cast %37 : vector<4x8xf32> to vector<4x8x1xf32>
    %39 = tpu.reciprocal %38 {approx = true} : vector<4x8x1xf32> -> vector<4x8x1xf32>
    %40 = vector.broadcast %39 : vector<4x8x1xf32> to vector<4x8x16xf32>
    %41 = arith.mulf %36, %40 : vector<4x8x16xf32>
    "tpu.trace_start"() <{level = 10 : i32, message = "bqk,bkd->bqd"}> : () -> ()
    %cst_11 = arith.constant dense<0.000000e+00> : vector<4x8x8xf32>
    %42 = tpu.matmul %41, %20, %cst_11 {dimension_numbers = #tpu.dot_dimension_numbers<[2], [1], [1], [2], [0, 0, 0, 1, 1, 2], [0], [0]>} : vector<4x8x16xf32>, vector<4x16x8xf32>, vector<4x8x8xf32> -> vector<4x8x8xf32>
    "tpu.trace_stop"() : () -> ()
    %43 = arith.addf %30, %42 : vector<4x8x8xf32>
    %44 = vector.extract_strided_slice %43 {offsets = [0, 0, 0], sizes = [1, 8, 8], strides = [1, 1, 1]} : vector<4x8x8xf32> to vector<1x8x8xf32>
    %45 = vector.extract_strided_slice %43 {offsets = [1, 0, 0], sizes = [1, 8, 8], strides = [1, 1, 1]} : vector<4x8x8xf32> to vector<1x8x8xf32>
    %46 = vector.extract_strided_slice %43 {offsets = [2, 0, 0], sizes = [1, 8, 8], strides = [1, 1, 1]} : vector<4x8x8xf32> to vector<1x8x8xf32>
    %47 = vector.extract_strided_slice %43 {offsets = [3, 0, 0], sizes = [1, 8, 8], strides = [1, 1, 1]} : vector<4x8x8xf32> to vector<1x8x8xf32>
    %48 = tpu.concatenate %44, %45, %46, %47 in 2 : vector<1x8x8xf32>, vector<1x8x8xf32>, vector<1x8x8xf32>, vector<1x8x8xf32> -> vector<1x8x32xf32>
    %49 = vector.shape_cast %48 : vector<1x8x32xf32> to vector<8x32xf32>
    %c0_12 = arith.constant 0 : index
    %c0_13 = arith.constant 0 : index
    %50 = vector.load %arg5[%c0_12, %c0_13] : memref<32x32xf32, #tpu.memory_space<vmem>>, vector<32x32xf32>
    %cst_14 = arith.constant dense<0.000000e+00> : vector<8x32xf32>
    %51 = tpu.matmul %49, %50, %cst_14 {dimension_numbers = #tpu.dot_dimension_numbers<[1], [0], [0], [1], [0, 0, 1, 1], [], []>} : vector<8x32xf32>, vector<32x32xf32>, vector<8x32xf32> -> vector<8x32xf32>
    %c0_15 = arith.constant 0 : index
    %c0_16 = arith.constant 0 : index
    %52 = vector.load %arg6[%c0_15, %c0_16] : memref<1x32xf32, #tpu.memory_space<vmem>>, vector<1x32xf32>
    %53 = vector.broadcast %52 : vector<1x32xf32> to vector<8x32xf32>
    %54 = arith.addf %51, %53 : vector<8x32xf32>
    %cst_17 = arith.constant 0.000000e+00 : f32
    %55 = vector.broadcast %cst_17 : f32 to vector<8x32xf32>
    %56 = arith.maximumf %54, %55 : vector<8x32xf32>
    %57 = arith.addf %49, %56 : vector<8x32xf32>
    %c0_18 = arith.constant 0 : index
    %c0_19 = arith.constant 0 : index
    %58 = vector.load %arg7[%c0_18, %c0_19] : memref<8x32xf32, #tpu.memory_space<vmem>>, vector<8x32xf32>
    %cst_20 = arith.constant dense<0.000000e+00> : vector<16x32xf32>
    %59 = tpu.matmul %1, %58, %cst_20 {dimension_numbers = #tpu.dot_dimension_numbers<[1], [0], [0], [1], [0, 0, 1, 1], [], []>} : vector<16x8xf32>, vector<8x32xf32>, vector<16x32xf32> -> vector<16x32xf32>
    %c0_21 = arith.constant 0 : index
    %c0_22 = arith.constant 0 : index
    %60 = vector.load %arg8[%c0_21, %c0_22] : memref<1x32xf32, #tpu.memory_space<vmem>>, vector<1x32xf32>
    %61 = vector.broadcast %60 : vector<1x32xf32> to vector<16x32xf32>
    %62 = arith.addf %59, %61 : vector<16x32xf32>
    %c0_23 = arith.constant 0 : index
    %c0_24 = arith.constant 0 : index
    %63 = vector.load %arg9[%c0_23, %c0_24] : memref<32x64xf32, #tpu.memory_space<vmem>>, vector<32x64xf32>
    %cst_25 = arith.constant dense<0.000000e+00> : vector<8x64xf32>
    %64 = tpu.matmul %57, %63, %cst_25 {dimension_numbers = #tpu.dot_dimension_numbers<[1], [0], [0], [1], [0, 0, 1, 1], [], []>} : vector<8x32xf32>, vector<32x64xf32>, vector<8x64xf32> -> vector<8x64xf32>
    %c0_26 = arith.constant 0 : index
    %c0_27 = arith.constant 0 : index
    %65 = vector.load %arg10[%c0_26, %c0_27] : memref<1x64xf32, #tpu.memory_space<vmem>>, vector<1x64xf32>
    %66 = vector.broadcast %65 : vector<1x64xf32> to vector<8x64xf32>
    %67 = arith.addf %64, %66 : vector<8x64xf32>
    %68 = vector.shape_cast %62 : vector<16x32xf32> to vector<1x16x32xf32>
    %69 = vector.extract_strided_slice %68 {offsets = [0, 0, 0], sizes = [1, 16, 8], strides = [1, 1, 1]} : vector<1x16x32xf32> to vector<1x16x8xf32>
    %70 = vector.extract_strided_slice %68 {offsets = [0, 0, 8], sizes = [1, 16, 8], strides = [1, 1, 1]} : vector<1x16x32xf32> to vector<1x16x8xf32>
    %71 = vector.extract_strided_slice %68 {offsets = [0, 0, 16], sizes = [1, 16, 8], strides = [1, 1, 1]} : vector<1x16x32xf32> to vector<1x16x8xf32>
    %72 = vector.extract_strided_slice %68 {offsets = [0, 0, 24], sizes = [1, 16, 8], strides = [1, 1, 1]} : vector<1x16x32xf32> to vector<1x16x8xf32>
    %73 = tpu.concatenate %69, %70, %71, %72 in 0 : vector<1x16x8xf32>, vector<1x16x8xf32>, vector<1x16x8xf32>, vector<1x16x8xf32> -> vector<4x16x8xf32>
    %74 = vector.extract_strided_slice %67 {offsets = [0, 0], sizes = [8, 32], strides = [1, 1]} : vector<8x64xf32> to vector<8x32xf32>
    %75 = vector.shape_cast %74 : vector<8x32xf32> to vector<1x8x32xf32>
    %76 = vector.extract_strided_slice %75 {offsets = [0, 0, 0], sizes = [1, 8, 8], strides = [1, 1, 1]} : vector<1x8x32xf32> to vector<1x8x8xf32>
    %77 = vector.extract_strided_slice %75 {offsets = [0, 0, 8], sizes = [1, 8, 8], strides = [1, 1, 1]} : vector<1x8x32xf32> to vector<1x8x8xf32>
    %78 = vector.extract_strided_slice %75 {offsets = [0, 0, 16], sizes = [1, 8, 8], strides = [1, 1, 1]} : vector<1x8x32xf32> to vector<1x8x8xf32>
    %79 = vector.extract_strided_slice %75 {offsets = [0, 0, 24], sizes = [1, 8, 8], strides = [1, 1, 1]} : vector<1x8x32xf32> to vector<1x8x8xf32>
    %80 = tpu.concatenate %76, %77, %78, %79 in 0 : vector<1x8x8xf32>, vector<1x8x8xf32>, vector<1x8x8xf32>, vector<1x8x8xf32> -> vector<4x8x8xf32>
    %81 = vector.extract_strided_slice %67 {offsets = [0, 32], sizes = [8, 32], strides = [1, 1]} : vector<8x64xf32> to vector<8x32xf32>
    %82 = vector.shape_cast %81 : vector<8x32xf32> to vector<1x8x32xf32>
    %83 = vector.extract_strided_slice %82 {offsets = [0, 0, 0], sizes = [1, 8, 8], strides = [1, 1, 1]} : vector<1x8x32xf32> to vector<1x8x8xf32>
    %84 = vector.extract_strided_slice %82 {offsets = [0, 0, 8], sizes = [1, 8, 8], strides = [1, 1, 1]} : vector<1x8x32xf32> to vector<1x8x8xf32>
    %85 = vector.extract_strided_slice %82 {offsets = [0, 0, 16], sizes = [1, 8, 8], strides = [1, 1, 1]} : vector<1x8x32xf32> to vector<1x8x8xf32>
    %86 = vector.extract_strided_slice %82 {offsets = [0, 0, 24], sizes = [1, 8, 8], strides = [1, 1, 1]} : vector<1x8x32xf32> to vector<1x8x8xf32>
    %87 = tpu.concatenate %83, %84, %85, %86 in 0 : vector<1x8x8xf32>, vector<1x8x8xf32>, vector<1x8x8xf32>, vector<1x8x8xf32> -> vector<4x8x8xf32>
    "tpu.trace_start"() <{level = 10 : i32, message = "bqd,bkd->bqk"}> : () -> ()
    %cst_28 = arith.constant dense<0.000000e+00> : vector<4x16x8xf32>
    %88 = tpu.matmul %73, %80, %cst_28 {dimension_numbers = #tpu.dot_dimension_numbers<[2], [2], [1], [1], [0, 0, 0, 1, 1, 1], [0], [0]>} : vector<4x16x8xf32>, vector<4x8x8xf32>, vector<4x16x8xf32> -> vector<4x16x8xf32>
    "tpu.trace_stop"() : () -> ()
    %cst_29 = arith.constant dense<0xFF800000> : vector<4x16xf32>
    %89 = vector.multi_reduction <maximumf>, %88, %cst_29 [2] : vector<4x16x8xf32> to vector<4x16xf32>
    %90 = vector.shape_cast %89 : vector<4x16xf32> to vector<4x16x1xf32>
    %91 = vector.broadcast %90 : vector<4x16x1xf32> to vector<4x16x8xf32>
    %92 = arith.subf %88, %91 : vector<4x16x8xf32>
    %93 = math.exp %92 : vector<4x16x8xf32>
    %cst_30 = arith.constant dense<0.000000e+00> : vector<4x16xf32>
    %94 = vector.multi_reduction <add>, %93, %cst_30 [2] : vector<4x16x8xf32> to vector<4x16xf32>
    %95 = vector.shape_cast %94 : vector<4x16xf32> to vector<4x16x1xf32>
    %96 = tpu.reciprocal %95 {approx = true} : vector<4x16x1xf32> -> vector<4x16x1xf32>
    %97 = vector.broadcast %96 : vector<4x16x1xf32> to vector<4x16x8xf32>
    %98 = arith.mulf %93, %97 : vector<4x16x8xf32>
    "tpu.trace_start"() <{level = 10 : i32, message = "bqk,bkd->bqd"}> : () -> ()
    %cst_31 = arith.constant dense<0.000000e+00> : vector<4x16x8xf32>
    %99 = tpu.matmul %98, %87, %cst_31 {dimension_numbers = #tpu.dot_dimension_numbers<[2], [1], [1], [2], [0, 0, 0, 1, 1, 2], [0], [0]>} : vector<4x16x8xf32>, vector<4x8x8xf32>, vector<4x16x8xf32> -> vector<4x16x8xf32>
    "tpu.trace_stop"() : () -> ()
    %100 = arith.addf %73, %99 : vector<4x16x8xf32>
    %101 = vector.extract_strided_slice %100 {offsets = [0, 0, 0], sizes = [1, 16, 8], strides = [1, 1, 1]} : vector<4x16x8xf32> to vector<1x16x8xf32>
    %102 = vector.extract_strided_slice %100 {offsets = [1, 0, 0], sizes = [1, 16, 8], strides = [1, 1, 1]} : vector<4x16x8xf32> to vector<1x16x8xf32>
    %103 = vector.extract_strided_slice %100 {offsets = [2, 0, 0], sizes = [1, 16, 8], strides = [1, 1, 1]} : vector<4x16x8xf32> to vector<1x16x8xf32>
    %104 = vector.extract_strided_slice %100 {offsets = [3, 0, 0], sizes = [1, 16, 8], strides = [1, 1, 1]} : vector<4x16x8xf32> to vector<1x16x8xf32>
    %105 = tpu.concatenate %101, %102, %103, %104 in 2 : vector<1x16x8xf32>, vector<1x16x8xf32>, vector<1x16x8xf32>, vector<1x16x8xf32> -> vector<1x16x32xf32>
    %106 = vector.shape_cast %105 : vector<1x16x32xf32> to vector<16x32xf32>
    %c0_32 = arith.constant 0 : index
    %c0_33 = arith.constant 0 : index
    %107 = vector.load %arg11[%c0_32, %c0_33] : memref<32x32xf32, #tpu.memory_space<vmem>>, vector<32x32xf32>
    %cst_34 = arith.constant dense<0.000000e+00> : vector<16x32xf32>
    %108 = tpu.matmul %106, %107, %cst_34 {dimension_numbers = #tpu.dot_dimension_numbers<[1], [0], [0], [1], [0, 0, 1, 1], [], []>} : vector<16x32xf32>, vector<32x32xf32>, vector<16x32xf32> -> vector<16x32xf32>
    %c0_35 = arith.constant 0 : index
    %c0_36 = arith.constant 0 : index
    %109 = vector.load %arg12[%c0_35, %c0_36] : memref<1x32xf32, #tpu.memory_space<vmem>>, vector<1x32xf32>
    %110 = vector.broadcast %109 : vector<1x32xf32> to vector<16x32xf32>
    %111 = arith.addf %108, %110 : vector<16x32xf32>
    %cst_37 = arith.constant 0.000000e+00 : f32
    %112 = vector.broadcast %cst_37 : f32 to vector<16x32xf32>
    %113 = arith.maximumf %111, %112 : vector<16x32xf32>
    %114 = arith.addf %106, %113 : vector<16x32xf32>
    %115 = vector.shape_cast %114 : vector<16x32xf32> to vector<1x16x32xf32>
    %c0_38 = arith.constant 0 : index
    %c0_39 = arith.constant 0 : index
    %c0_40 = arith.constant 0 : index
    %116 = vector.load %arg13[%c0_38, %c0_39, %c0_40] : memref<1x16x32xf32, #tpu.memory_space<vmem>>, vector<1x16x32xf32>
    tpu.vector_store %arg13[%c0_38, %c0_39, %c0_40], %115 {strides = array<i32>} : memref<1x16x32xf32, #tpu.memory_space<vmem>>, vector<1x16x32xf32>,
    return
  }
  func.func @transform_0(%arg0: i32) -> (i32, i32, i32) {
    %c0_i32 = arith.constant 0 : i32
    %c0_i32_0 = arith.constant 0 : i32
    %c0_i32_1 = arith.constant 0 : i32
    return %arg0, %c0_i32, %c0_i32_0 : i32, i32, i32
  }
  func.func @transform_1(%arg0: i32) -> (i32, i32) {
    %c0_i32 = arith.constant 0 : i32
    %c0_i32_0 = arith.constant 0 : i32
    %c0_i32_1 = arith.constant 0 : i32
    return %c0_i32, %c0_i32_0 : i32, i32
  }
  func.func @transform_2(%arg0: i32) -> (i32, i32) {
    %c0_i32 = arith.constant 0 : i32
    %c0_i32_0 = arith.constant 0 : i32
    %c0_i32_1 = arith.constant 0 : i32
    return %c0_i32, %c0_i32_0 : i32, i32
  }
  func.func @transform_3(%arg0: i32) -> (i32, i32) {
    %c0_i32 = arith.constant 0 : i32
    %c0_i32_0 = arith.constant 0 : i32
    %c0_i32_1 = arith.constant 0 : i32
    return %c0_i32, %c0_i32_0 : i32, i32
  }
  func.func @transform_4(%arg0: i32) -> (i32, i32) {
    %c0_i32 = arith.constant 0 : i32
    %c0_i32_0 = arith.constant 0 : i32
    %c0_i32_1 = arith.constant 0 : i32
    return %c0_i32, %c0_i32_0 : i32, i32
  }
  func.func @transform_5(%arg0: i32) -> (i32, i32) {
    %c0_i32 = arith.constant 0 : i32
    %c0_i32_0 = arith.constant 0 : i32
    %c0_i32_1 = arith.constant 0 : i32
    return %c0_i32, %c0_i32_0 : i32, i32
  }
  func.func @transform_6(%arg0: i32) -> (i32, i32) {
    %c0_i32 = arith.constant 0 : i32
    %c0_i32_0 = arith.constant 0 : i32
    %c0_i32_1 = arith.constant 0 : i32
    return %c0_i32, %c0_i32_0 : i32, i32
  }
  func.func @transform_7(%arg0: i32) -> (i32, i32) {
    %c0_i32 = arith.constant 0 : i32
    %c0_i32_0 = arith.constant 0 : i32
    %c0_i32_1 = arith.constant 0 : i32
    return %c0_i32, %c0_i32_0 : i32, i32
  }
  func.func @transform_8(%arg0: i32) -> (i32, i32) {
    %c0_i32 = arith.constant 0 : i32
    %c0_i32_0 = arith.constant 0 : i32
    %c0_i32_1 = arith.constant 0 : i32
    return %c0_i32, %c0_i32_0 : i32, i32
  }
  func.func @transform_9(%arg0: i32) -> (i32, i32) {
    %c0_i32 = arith.constant 0 : i32
    %c0_i32_0 = arith.constant 0 : i32
    %c0_i32_1 = arith.constant 0 : i32
    return %c0_i32, %c0_i32_0 : i32, i32
  }
  func.func @transform_10(%arg0: i32) -> (i32, i32) {
    %c0_i32 = arith.constant 0 : i32
    %c0_i32_0 = arith.constant 0 : i32
    %c0_i32_1 = arith.constant 0 : i32
    return %c0_i32, %c0_i32_0 : i32, i32
  }
  func.func @transform_11(%arg0: i32) -> (i32, i32) {
    %c0_i32 = arith.constant 0 : i32
    %c0_i32_0 = arith.constant 0 : i32
    %c0_i32_1 = arith.constant 0 : i32
    return %c0_i32, %c0_i32_0 : i32, i32
  }
  func.func @transform_12(%arg0: i32) -> (i32, i32, i32) {
    %c0_i32 = arith.constant 0 : i32
    %c0_i32_0 = arith.constant 0 : i32
    %c0_i32_1 = arith.constant 0 : i32
    return %arg0, %c0_i32, %c0_i32_0 : i32, i32, i32
  }
}

</mosaic_0001>

<llo_original>
// kernel: tpu_custom_call.1
$region0: #{tpu_custom_call.1}
  #allocation0 [shape = 'u32[]', space=smem, size = 0x4, offset = 0x4, fixed_abs, tag = 'smem constant byte address 0x4 - core index']
  #allocation1 [shape = 'u32[144,128]{1,0:T(1,128)}', space=vmem, size = 0x12000, scoped, tag = 'internal scratch']
  %s0 = inlined_call_operand.vmem [shape: f32[2,16,8], index: 0, kind: input, shape index: {}]
  %s1 = inlined_call_operand.hbm [shape: f32[8,32], index: 1, kind: input, shape index: {}]
  %s2 = inlined_call_operand.hbm [shape: f32[8,64], index: 2, kind: input, shape index: {}]
  %s3 = inlined_call_operand.vmem [shape: f32[1,64], index: 3, kind: input, shape index: {}]
  %s4 = inlined_call_operand.vmem [shape: f32[32,32], index: 4, kind: input, shape index: {}]
  %s5 = inlined_call_operand.vmem [shape: f32[1,32], index: 5, kind: input, shape index: {}]
  %s6 = inlined_call_operand.hbm [shape: f32[8,32], index: 6, kind: input, shape index: {}]
  %s7 = inlined_call_operand.vmem [shape: f32[1,32], index: 7, kind: input, shape index: {}]
  %s8 = inlined_call_operand.vmem [shape: f32[32,64], index: 8, kind: input, shape index: {}]
  %s9 = inlined_call_operand.vmem [shape: f32[1,64], index: 9, kind: input, shape index: {}]
  %s10 = inlined_call_operand.hbm [shape: f32[32,32], index: 10, kind: input, shape index: {}]
  %s11 = inlined_call_operand.vmem [shape: f32[1,32], index: 11, kind: input, shape index: {}]
  %s12 = inlined_call_operand.hbm [shape: f32[2,16,32], index: 12, kind: output, shape index: {}]
  %s13 = sld [smem:[#allocation0]]
  $region97: #{tpu_custom_call.1} parent=0
    _
  %s15 = ssub.s32 1, %s13
  %s16 = scalar_select 0, %s15, %s13
  $region1: #{tpu_custom_call.1} parent=0
    #allocation2 [shape = 'u8[4096]{0}', space=vmem, size = 0x1000, scoped, tag = 'input window, operand 1, single buffered']
    #allocation3 [shape = 's32[2]{0}', space=sflag, size = 0x8, scoped, tag = 'scoped memory for tpu_custom_call.1']
    #allocation4 [shape = 's32[2]{0}', space=sflag, size = 0x8, scoped, tag = 'scoped memory for tpu_custom_call.1']
    #allocation5 [shape = 'u8[4096]{0}', space=vmem, size = 0x1000, scoped, tag = 'input window, operand 2, single buffered']
    #allocation6 [shape = 's32[1]{0}', space=sflag, size = 0x4, scoped, tag = 'scoped memory for tpu_custom_call.1']
    #allocation7 [shape = 'u8[4096]{0}', space=vmem, size = 0x1000, scoped, tag = 'input window, operand 6, single buffered']
    #allocation8 [shape = 'u8[16384]{0}', space=vmem, size = 0x4000, scoped, tag = 'input window, operand 10, single buffered']
    #allocation9 [shape = 's32[1]{0}', space=sflag, size = 0x4, scoped, tag = 'scoped memory for tpu_custom_call.1']
    #allocation10 [shape = 'u8[16384]{0}', space=vmem, size = 0x4000, scoped, tag = 'output window, operand 0']
    %17 = vsyncpa [#allocation3], 0
    %18 = vsyncpa [#allocation6], 0
    %19 = vsyncpa [#allocation9], 0
    %20 = vsyncpa [#allocation4], 0
    %s21 = scalar_lea.sflag [#allocation4], 1
    %22 = vsyncpa %s21, 0
    loop: start=0, step=1, limit=4
    $region2: #{tpu_custom_call.1} parent=1 // loop_pre_header
      _
    $region3: #{tpu_custom_call.1} parent=1 // loop_header
      %s24 = sphi 0, %s28
      %p25 = scmp.ge.s32.totalorder %s24, 4
      %s34 = sphi 0, %s36
      %s37 = sphi 0, %s34
      %s38 = sphi 0, %s37
      %s54 = sphi 0, %s38
      %s58 = sphi 0, %s58
      %s60 = sphi 0, %s58
      %s61 = sphi 0, %s60
      %s75 = sphi 0, %s61
      %s79 = sphi 0, %s79
      %s81 = sphi 0, %s79
      %s82 = sphi 0, %s81
      %s96 = sphi 0, %s82
      %s100 = sphi 0, %s100
      %s102 = sphi 0, %s100
      %s103 = sphi 0, %s102
      %s117 = sphi 0, %s103
      %s121 = sphi 0, %s121
      %s123 = sphi 0, %s121
      %s124 = sphi 0, %s123
      %s138 = sphi 0, %s124
      %s142 = sphi 0, %s142
      %s144 = sphi 0, %s142
      %s145 = sphi 0, %s144
      %s159 = sphi 0, %s145
      %s163 = sphi 0, %s163
      %s165 = sphi 0, %s163
      %s166 = sphi 0, %s165
      %s180 = sphi 0, %s166
      %s184 = sphi 0, %s184
      %s186 = sphi 0, %s184
      %s187 = sphi 0, %s186
      %s201 = sphi 0, %s187
      %s205 = sphi 0, %s205
      %s207 = sphi 0, %s205
      %s208 = sphi 0, %s207
      %s222 = sphi 0, %s208
      %s226 = sphi 0, %s226
      %s228 = sphi 0, %s226
      %s229 = sphi 0, %s228
      %s243 = sphi 0, %s229
      %s247 = sphi 0, %s247
      %s249 = sphi 0, %s247
      %s250 = sphi 0, %s249
      %s264 = sphi 0, %s250
      %s268 = sphi 0, %s268
      %s270 = sphi 0, %s268
      %s271 = sphi 0, %s270
      %s285 = sphi 0, %s271
      %s291 = sphi 0, %s293
      %s294 = sphi 0, %s291
      %s295 = sphi 0, %s294
      %s311 = sphi 0, %s295
    $region4: #{tpu_custom_call.1} parent=1 // loop_header_branch
      %27 = sbr.rel (%p25) target = $region8
    $region5: #{tpu_custom_call.1} parent=1 // loop_body
      %s29 = ssub.s32 %s24, 1
      %s30 = ssub.s32 %s24, 2
      %s31 = sadd.s32 %s24, 1
      %s32 = ssub.s32 %s24, %s31
      %p33 = scmp.eq.s32.totalorder %s32, 0
      %s35 = sadd.s32 %s34, 1
      %s36 = scalar_select %p33, %s34, %s35
      %p39 = pneg %p33
      %p40 = scmp.eq.s32.totalorder %s24, 1
      %p41 = por %p39, %p40
      %p42 = scmp.ne.s32.totalorder %s34, %s37
      %p43 = scmp.eq.s32.totalorder %s24, 0
      %p44 = por %p42, %p43
      %p45 = scmp.ne.s32.totalorder %s34, %s37
      %p46 = scmp.eq.s32.totalorder %s29, 1
      %p47 = por %p45, %p46
      %p48 = scmp.ne.s32.totalorder %s37, %s38
      %p49 = scmp.eq.s32.totalorder %s29, 0
      %p50 = por %p48, %p49
      %p51 = scmp.ne.s32.totalorder %s37, %s38
      %p52 = scmp.eq.s32.totalorder %s30, 1
      %p53 = por %p51, %p52
      %p55 = scmp.ne.s32.totalorder %s38, %s54
      %p56 = scmp.eq.s32.totalorder %s30, 0
      %p57 = por %p55, %p56
      %s59 = sadd.s32 %s58, 1
      %p62 = scmp.eq.s32.totalorder %s24, 1
      %p63 = scmp.ne.s32.totalorder %s58, %s60
      %p64 = scmp.eq.s32.totalorder %s24, 0
      %p65 = por %p63, %p64
      %p66 = scmp.ne.s32.totalorder %s58, %s60
      %p67 = scmp.eq.s32.totalorder %s29, 1
      %p68 = por %p66, %p67
      %p69 = scmp.ne.s32.totalorder %s60, %s61
      %p70 = scmp.eq.s32.totalorder %s29, 0
      %p71 = por %p69, %p70
      %p72 = scmp.ne.s32.totalorder %s60, %s61
      %p73 = scmp.eq.s32.totalorder %s30, 1
      %p74 = por %p72, %p73
      %p76 = scmp.ne.s32.totalorder %s61, %s75
      %p77 = scmp.eq.s32.totalorder %s30, 0
      %p78 = por %p76, %p77
      %s80 = sadd.s32 %s79, 1
      %p83 = scmp.eq.s32.totalorder %s24, 1
      %p84 = scmp.ne.s32.totalorder %s79, %s81
      %p85 = scmp.eq.s32.totalorder %s24, 0
      %p86 = por %p84, %p85
      %p87 = scmp.ne.s32.totalorder %s79, %s81
      %p88 = scmp.eq.s32.totalorder %s29, 1
      %p89 = por %p87, %p88
      %p90 = scmp.ne.s32.totalorder %s81, %s82
      %p91 = scmp.eq.s32.totalorder %s29, 0
      %p92 = por %p90, %p91
      %p93 = scmp.ne.s32.totalorder %s81, %s82
      %p94 = scmp.eq.s32.totalorder %s30, 1
      %p95 = por %p93, %p94
      %p97 = scmp.ne.s32.totalorder %s82, %s96
      %p98 = scmp.eq.s32.totalorder %s30, 0
      %p99 = por %p97, %p98
      %s101 = sadd.s32 %s100, 1
      %p104 = scmp.eq.s32.totalorder %s24, 1
      %p105 = scmp.ne.s32.totalorder %s100, %s102
      %p106 = scmp.eq.s32.totalorder %s24, 0
      %p107 = por %p105, %p106
      %p108 = scmp.ne.s32.totalorder %s100, %s102
      %p109 = scmp.eq.s32.totalorder %s29, 1
      %p110 = por %p108, %p109
      %p111 = scmp.ne.s32.totalorder %s102, %s103
      %p112 = scmp.eq.s32.totalorder %s29, 0
      %p113 = por %p111, %p112
      %p114 = scmp.ne.s32.totalorder %s102, %s103
      %p115 = scmp.eq.s32.totalorder %s30, 1
      %p116 = por %p114, %p115
      %p118 = scmp.ne.s32.totalorder %s103, %s117
      %p119 = scmp.eq.s32.totalorder %s30, 0
      %p120 = por %p118, %p119
      %s122 = sadd.s32 %s121, 1
      %p125 = scmp.eq.s32.totalorder %s24, 1
      %p126 = scmp.ne.s32.totalorder %s121, %s123
      %p127 = scmp.eq.s32.totalorder %s24, 0
      %p128 = por %p126, %p127
      %p129 = scmp.ne.s32.totalorder %s121, %s123
      %p130 = scmp.eq.s32.totalorder %s29, 1
      %p131 = por %p129, %p130
      %p132 = scmp.ne.s32.totalorder %s123, %s124
      %p133 = scmp.eq.s32.totalorder %s29, 0
      %p134 = por %p132, %p133
      %p135 = scmp.ne.s32.totalorder %s123, %s124
      %p136 = scmp.eq.s32.totalorder %s30, 1
      %p137 = por %p135, %p136
      %p139 = scmp.ne.s32.totalorder %s124, %s138
      %p140 = scmp.eq.s32.totalorder %s30, 0
      %p141 = por %p139, %p140
      %s143 = sadd.s32 %s142, 1
      %p146 = scmp.eq.s32.totalorder %s24, 1
      %p147 = scmp.ne.s32.totalorder %s142, %s144
      %p148 = scmp.eq.s32.totalorder %s24, 0
      %p149 = por %p147, %p148
      %p150 = scmp.ne.s32.totalorder %s142, %s144
      %p151 = scmp.eq.s32.totalorder %s29, 1
      %p152 = por %p150, %p151
      %p153 = scmp.ne.s32.totalorder %s144, %s145
      %p154 = scmp.eq.s32.totalorder %s29, 0
      %p155 = por %p153, %p154
      %p156 = scmp.ne.s32.totalorder %s144, %s145
      %p157 = scmp.eq.s32.totalorder %s30, 1
      %p158 = por %p156, %p157
      %p160 = scmp.ne.s32.totalorder %s145, %s159
      %p161 = scmp.eq.s32.totalorder %s30, 0
      %p162 = por %p160, %p161
      %s164 = sadd.s32 %s163, 1
      %p167 = scmp.eq.s32.totalorder %s24, 1
      %p168 = scmp.ne.s32.totalorder %s163, %s165
      %p169 = scmp.eq.s32.totalorder %s24, 0
      %p170 = por %p168, %p169
      %p171 = scmp.ne.s32.totalorder %s163, %s165
      %p172 = scmp.eq.s32.totalorder %s29, 1
      %p173 = por %p171, %p172
      %p174 = scmp.ne.s32.totalorder %s165, %s166
      %p175 = scmp.eq.s32.totalorder %s29, 0
      %p176 = por %p174, %p175
      %p177 = scmp.ne.s32.totalorder %s165, %s166
      %p178 = scmp.eq.s32.totalorder %s30, 1
      %p179 = por %p177, %p178
      %p181 = scmp.ne.s32.totalorder %s166, %s180
      %p182 = scmp.eq.s32.totalorder %s30, 0
      %p183 = por %p181, %p182
      %s185 = sadd.s32 %s184, 1
      %p188 = scmp.eq.s32.totalorder %s24, 1
      %p189 = scmp.ne.s32.totalorder %s184, %s186
      %p190 = scmp.eq.s32.totalorder %s24, 0
      %p191 = por %p189, %p190
      %p192 = scmp.ne.s32.totalorder %s184, %s186
      %p193 = scmp.eq.s32.totalorder %s29, 1
      %p194 = por %p192, %p193
      %p195 = scmp.ne.s32.totalorder %s186, %s187
      %p196 = scmp.eq.s32.totalorder %s29, 0
      %p197 = por %p195, %p196
      %p198 = scmp.ne.s32.totalorder %s186, %s187
      %p199 = scmp.eq.s32.totalorder %s30, 1
      %p200 = por %p198, %p199
      %p202 = scmp.ne.s32.totalorder %s187, %s201
      %p203 = scmp.eq.s32.totalorder %s30, 0
      %p204 = por %p202, %p203
      %s206 = sadd.s32 %s205, 1
      %p209 = scmp.eq.s32.totalorder %s24, 1
      %p210 = scmp.ne.s32.totalorder %s205, %s207
      %p211 = scmp.eq.s32.totalorder %s24, 0
      %p212 = por %p210, %p211
      %p213 = scmp.ne.s32.totalorder %s205, %s207
      %p214 = scmp.eq.s32.totalorder %s29, 1
      %p215 = por %p213, %p214
      %p216 = scmp.ne.s32.totalorder %s207, %s208
      %p217 = scmp.eq.s32.totalorder %s29, 0
      %p218 = por %p216, %p217
      %p219 = scmp.ne.s32.totalorder %s207, %s208
      %p220 = scmp.eq.s32.totalorder %s30, 1
      %p221 = por %p219, %p220
      %p223 = scmp.ne.s32.totalorder %s208, %s222
      %p224 = scmp.eq.s32.totalorder %s30, 0
      %p225 = por %p223, %p224
      %s227 = sadd.s32 %s226, 1
      %p230 = scmp.eq.s32.totalorder %s24, 1
      %p231 = scmp.ne.s32.totalorder %s226, %s228
      %p232 = scmp.eq.s32.totalorder %s24, 0
      %p233 = por %p231, %p232
      %p234 = scmp.ne.s32.totalorder %s226, %s228
      %p235 = scmp.eq.s32.totalorder %s29, 1
      %p236 = por %p234, %p235
      %p237 = scmp.ne.s32.totalorder %s228, %s229
      %p238 = scmp.eq.s32.totalorder %s29, 0
      %p239 = por %p237, %p238
      %p240 = scmp.ne.s32.totalorder %s228, %s229
      %p241 = scmp.eq.s32.totalorder %s30, 1
      %p242 = por %p240, %p241
      %p244 = scmp.ne.s32.totalorder %s229, %s243
      %p245 = scmp.eq.s32.totalorder %s30, 0
      %p246 = por %p244, %p245
      %s248 = sadd.s32 %s247, 1
      %p251 = scmp.eq.s32.totalorder %s24, 1
      %p252 = scmp.ne.s32.totalorder %s247, %s249
      %p253 = scmp.eq.s32.totalorder %s24, 0
      %p254 = por %p252, %p253
      %p255 = scmp.ne.s32.totalorder %s247, %s249
      %p256 = scmp.eq.s32.totalorder %s29, 1
      %p257 = por %p255, %p256
      %p258 = scmp.ne.s32.totalorder %s249, %s250
      %p259 = scmp.eq.s32.totalorder %s29, 0
      %p260 = por %p258, %p259
      %p261 = scmp.ne.s32.totalorder %s249, %s250
      %p262 = scmp.eq.s32.totalorder %s30, 1
      %p263 = por %p261, %p262
      %p265 = scmp.ne.s32.totalorder %s250, %s264
      %p266 = scmp.eq.s32.totalorder %s30, 0
      %p267 = por %p265, %p266
      %s269 = sadd.s32 %s268, 1
      %p272 = scmp.eq.s32.totalorder %s24, 1
      %p273 = scmp.ne.s32.totalorder %s268, %s270
      %p274 = scmp.eq.s32.totalorder %s24, 0
      %p275 = por %p273, %p274
      %p276 = scmp.ne.s32.totalorder %s268, %s270
      %p277 = scmp.eq.s32.totalorder %s29, 1
      %p278 = por %p276, %p277
      %p279 = scmp.ne.s32.totalorder %s270, %s271
      %p280 = scmp.eq.s32.totalorder %s29, 0
      %p281 = por %p279, %p280
      %p282 = scmp.ne.s32.totalorder %s270, %s271
      %p283 = scmp.eq.s32.totalorder %s30, 1
      %p284 = por %p282, %p283
      %p286 = scmp.ne.s32.totalorder %s271, %s285
      %p287 = scmp.eq.s32.totalorder %s30, 0
      %p288 = por %p286, %p287
      %s289 = ssub.s32 %s24, %s31
      %p290 = scmp.eq.s32.totalorder %s289, 0
      %s292 = sadd.s32 %s291, 1
      %s293 = scalar_select %p290, %s291, %s292
      %p296 = pneg %p290
      %p297 = scmp.eq.s32.totalorder %s24, 1
      %p298 = por %p296, %p297
      %p299 = scmp.ne.s32.totalorder %s291, %s294
      %p300 = scmp.eq.s32.totalorder %s24, 0
      %p301 = por %p299, %p300
      %p302 = scmp.ne.s32.totalorder %s291, %s294
      %p303 = scmp.eq.s32.totalorder %s29, 1
      %p304 = por %p302, %p303
      %p305 = scmp.ne.s32.totalorder %s294, %s295
      %p306 = scmp.eq.s32.totalorder %s29, 0
      %p307 = por %p305, %p306
      %p308 = scmp.ne.s32.totalorder %s294, %s295
      %p309 = scmp.eq.s32.totalorder %s30, 1
      %p310 = por %p308, %p309
      %p312 = scmp.ne.s32.totalorder %s295, %s311
      %p313 = scmp.eq.s32.totalorder %s30, 0
      %p314 = por %p312, %p313
      %p315 = scmp.le.s32.totalorder 1, %s24
      %p316 = scmp.lt.s32.totalorder %s24, 3
      %p317 = pnand %p315, %p316
      %p318 = pneg %p317
      // Predicated region
      $region9: #{tpu_custom_call.1} parent=5 // pred_check
        _
      $region10: #{tpu_custom_call.1} parent=5 // pred_check_branch
        %320 = sbr.rel (%p317) target = $region12
      $region11: #{tpu_custom_call.1} parent=5 // pred_region
        %s321 = ssub.s32 %s24, 1
        // Predicated region
        $region13: #{tpu_custom_call.1} parent=11 // pred_check
          %p322 = pneg %p71
        $region14: #{tpu_custom_call.1} parent=11 // pred_check_branch
          %324 = sbr.rel (%p322) target = $region16
        $region15: #{tpu_custom_call.1} parent=11 // pred_region
          %s326 = ssub.s32 128, 128
          %327 = vsyncadd [#allocation3], %s326
          %s329 = sshll.u32 [#allocation2], 4
          %s330 = int_to_ptr.vmem [resolvable:$true] %s329
          %332 = dma.hbm_to_vmem [thread:$0]  %s1, 128, %s330, [#allocation3]
        $region16: #{tpu_custom_call.1} parent=11 // pred_fallthru
          _
        // Predicated region
        $region17: #{tpu_custom_call.1} parent=11 // pred_check
          %p333 = pneg %p92
        $region18: #{tpu_custom_call.1} parent=11 // pred_check_branch
          %335 = sbr.rel (%p333) target = $region20
        $region19: #{tpu_custom_call.1} parent=11 // pred_region
          %s337 = ssub.s32 128, 128
          %338 = vsyncadd [#allocation6], %s337
          %s340 = sshll.u32 [#allocation5], 4
          %s341 = int_to_ptr.vmem [resolvable:$true] %s340
          %343 = dma.hbm_to_vmem [thread:$0]  %s2, 128, %s341, [#allocation6]
        $region20: #{tpu_custom_call.1} parent=11 // pred_fallthru
          _
        // Predicated region
        $region21: #{tpu_custom_call.1} parent=11 // pred_check
          %p344 = pneg %p113
        $region22: #{tpu_custom_call.1} parent=11 // pred_check_branch
          %346 = sbr.rel (%p344) target = $region24
        $region23: #{tpu_custom_call.1} parent=11 // pred_region
          _
        $region24: #{tpu_custom_call.1} parent=11 // pred_fallthru
          _
        // Predicated region
        $region25: #{tpu_custom_call.1} parent=11 // pred_check
          %p347 = pneg %p134
        $region26: #{tpu_custom_call.1} parent=11 // pred_check_branch
          %349 = sbr.rel (%p347) target = $region28
        $region27: #{tpu_custom_call.1} parent=11 // pred_region
          _
        $region28: #{tpu_custom_call.1} parent=11 // pred_fallthru
          _
        // Predicated region
        $region29: #{tpu_custom_call.1} parent=11 // pred_check
          %p350 = pneg %p155
        $region30: #{tpu_custom_call.1} parent=11 // pred_check_branch
          %352 = sbr.rel (%p350) target = $region32
        $region31: #{tpu_custom_call.1} parent=11 // pred_region
          _
        $region32: #{tpu_custom_call.1} parent=11 // pred_fallthru
          _
        // Predicated region
        $region33: #{tpu_custom_call.1} parent=11 // pred_check
          %p353 = pneg %p176
        $region34: #{tpu_custom_call.1} parent=11 // pred_check_branch
          %355 = sbr.rel (%p353) target = $region36
        $region35: #{tpu_custom_call.1} parent=11 // pred_region
          %s357 = ssub.s32 128, 128
          %358 = vsyncadd [#allocation6], %s357
          %s360 = sshll.u32 [#allocation7], 4
          %s361 = int_to_ptr.vmem [resolvable:$true] %s360
          %363 = dma.hbm_to_vmem [thread:$0]  %s6, 128, %s361, [#allocation6]
        $region36: #{tpu_custom_call.1} parent=11 // pred_fallthru
          _
        // Predicated region
        $region37: #{tpu_custom_call.1} parent=11 // pred_check
          %p364 = pneg %p197
        $region38: #{tpu_custom_call.1} parent=11 // pred_check_branch
          %366 = sbr.rel (%p364) target = $region40
        $region39: #{tpu_custom_call.1} parent=11 // pred_region
          _
        $region40: #{tpu_custom_call.1} parent=11 // pred_fallthru
          _
        // Predicated region
        $region41: #{tpu_custom_call.1} parent=11 // pred_check
          %p367 = pneg %p218
        $region42: #{tpu_custom_call.1} parent=11 // pred_check_branch
          %369 = sbr.rel (%p367) target = $region44
        $region43: #{tpu_custom_call.1} parent=11 // pred_region
          _
        $region44: #{tpu_custom_call.1} parent=11 // pred_fallthru
          _
        // Predicated region
        $region45: #{tpu_custom_call.1} parent=11 // pred_check
          %p370 = pneg %p239
        $region46: #{tpu_custom_call.1} parent=11 // pred_check_branch
          %372 = sbr.rel (%p370) target = $region48
        $region47: #{tpu_custom_call.1} parent=11 // pred_region
          _
        $region48: #{tpu_custom_call.1} parent=11 // pred_fallthru
          _
        // Predicated region
        $region49: #{tpu_custom_call.1} parent=11 // pred_check
          %p373 = pneg %p260
        $region50: #{tpu_custom_call.1} parent=11 // pred_check_branch
          %375 = sbr.rel (%p373) target = $region52
        $region51: #{tpu_custom_call.1} parent=11 // pred_region
          %s377 = ssub.s32 512, 512
          %378 = vsyncadd [#allocation9], %s377
          %s379 = sshll.u32 [#allocation8], 4
          %s380 = int_to_ptr.vmem [resolvable:$true] %s379
          %385 = dma.hbm_to_vmem [thread:$0]  %s10, 512, %s380, [#allocation9], 128, 128, 8
        $region52: #{tpu_custom_call.1} parent=11 // pred_fallthru
          _
        // Predicated region
        $region53: #{tpu_custom_call.1} parent=11 // pred_check
          %p386 = pneg %p281
        $region54: #{tpu_custom_call.1} parent=11 // pred_check_branch
          %388 = sbr.rel (%p386) target = $region56
        $region55: #{tpu_custom_call.1} parent=11 // pred_region
          _
        $region56: #{tpu_custom_call.1} parent=11 // pred_fallthru
          _
      $region12: #{tpu_custom_call.1} parent=5 // pred_fallthru
        _
      %p389 = scmp.lt.s32.totalorder %s24, 2
      // Predicated region
      $region57: #{tpu_custom_call.1} parent=5 // pred_check
        %p390 = pneg %p389
      $region58: #{tpu_custom_call.1} parent=5 // pred_check_branch
        %392 = sbr.rel (%p390) target = $region60
      $region59: #{tpu_custom_call.1} parent=5 // pred_region
        // Predicated region
        $region61: #{tpu_custom_call.1} parent=59 // pred_check
          %p393 = pneg %p44
        $region62: #{tpu_custom_call.1} parent=59 // pred_check_branch
          %395 = sbr.rel (%p393) target = $region64
        $region63: #{tpu_custom_call.1} parent=59 // pred_region
          %p396 = scmp.lt.s32.totalorder %s24, 1
          %s397 = scalar_select %p396, %s24, 1
          %s398 = smul.addr %s397, 2
          %s399 = smul.addr %s398, 8
          %s400 = scalar_lea.vmem %s0, %s399
        $region64: #{tpu_custom_call.1} parent=59 // pred_fallthru
          _
      $region60: #{tpu_custom_call.1} parent=5 // pred_fallthru
        _
      %p401 = scmp.le.s32.totalorder 1, %s24
      %p402 = scmp.lt.s32.totalorder %s24, 3
      %p403 = pnand %p401, %p402
      %p404 = pneg %p403
      // Predicated region
      $region65: #{tpu_custom_call.1} parent=5 // pred_check
        _
      $region66: #{tpu_custom_call.1} parent=5 // pred_check_branch
        %406 = sbr.rel (%p403) target = $region68
      $region67: #{tpu_custom_call.1} parent=5 // pred_region
        %s407 = ssub.s32 %s24, 1
        // Predicated region
        $region69: #{tpu_custom_call.1} parent=67 // pred_check
          %p408 = pneg %p71
        $region70: #{tpu_custom_call.1} parent=67 // pred_check_branch
          %410 = sbr.rel (%p408) target = $region72
        $region71: #{tpu_custom_call.1} parent=67 // pred_region
          %411 = dma.done [#allocation3], 128
        $region72: #{tpu_custom_call.1} parent=67 // pred_fallthru
          _
        // Predicated region
        $region73: #{tpu_custom_call.1} parent=67 // pred_check
          %p412 = pneg %p92
        $region74: #{tpu_custom_call.1} parent=67 // pred_check_branch
          %414 = sbr.rel (%p412) target = $region76
        $region75: #{tpu_custom_call.1} parent=67 // pred_region
          %415 = dma.done [#allocation6], 128
        $region76: #{tpu_custom_call.1} parent=67 // pred_fallthru
          _
        // Predicated region
        $region77: #{tpu_custom_call.1} parent=67 // pred_check
          %p416 = pneg %p176
        $region78: #{tpu_custom_call.1} parent=67 // pred_check_branch
          %418 = sbr.rel (%p416) target = $region80
        $region79: #{tpu_custom_call.1} parent=67 // pred_region
          %419 = dma.done [#allocation6], 128
        $region80: #{tpu_custom_call.1} parent=67 // pred_fallthru
          _
        // Predicated region
        $region81: #{tpu_custom_call.1} parent=67 // pred_check
          %p420 = pneg %p260
        $region82: #{tpu_custom_call.1} parent=67 // pred_check_branch
          %422 = sbr.rel (%p420) target = $region84
        $region83: #{tpu_custom_call.1} parent=67 // pred_region
          %423 = dma.done [#allocation9], 512
        $region84: #{tpu_custom_call.1} parent=67 // pred_fallthru
          _
        %p424 = scmp.lt.s32.totalorder %s29, 1
        %s425 = scalar_select %p424, %s29, 1
        %s426 = smul.addr %s425, 2
        %s427 = smul.addr %s426, 8
        %s428 = scalar_lea.vmem %s0, %s427
        %p429 = pneg %p50
        %p430 = pneg %p47
        %p431 = pneg %p71
        %p432 = pneg %p68
        %p433 = pneg %p92
        %p434 = pneg %p89
        %p435 = pneg %p113
        %p436 = pneg %p110
        %p437 = pneg %p134
        %p438 = pneg %p131
        %p439 = pneg %p155
        %p440 = pneg %p152
        %p441 = pneg %p176
        %p442 = pneg %p173
        %p443 = pneg %p197
        %p444 = pneg %p194
        %p445 = pneg %p218
        %p446 = pneg %p215
        %p447 = pneg %p239
        %p448 = pneg %p236
        %p449 = pneg %p260
        %p450 = pneg %p257
        %p451 = pneg %p281
        %p452 = pneg %p278
        %p453 = pneg %p307
        %p454 = pneg %p304
        %s455 = sand.u32 %s294, 1
        %s456 = scalar_lea.sflag [#allocation4], %s455
        %s457 = sand.u32 %s294, 1
        %s458 = smul.addr %s457, 16
        %s459 = scalar_lea.vmem [#allocation10], %s458
        %p460 = scmp.lt.s32.totalorder %s29, 1
        %s461 = scalar_select %p460, %s29, 1
        %s462 = smul.addr %s461, 2
        %s463 = smul.addr %s462, 8
        %s464 = scalar_lea.vmem %s0, %s463
        %v465 = vld [vmem:[%s464] sm:$0xff]
        %v466 = vld [vmem:[%s464 + $0x8] sm:$0xff]
        %v467 = vld [vmem:[#allocation5] sm:$0xff]
        %v468 = vld [vmem:[%s3] sm:$0x1]
        %v470 = vlaneseq
        %v471 = vshrl.u32 %v470, 7
        %v472 = vsub.s32 0, %v471
        %v473 = vrot.slane %v468, %v472
        %vm475 = vcmask 64512
        %v477 = vsel %vm475, %v465, 0
        %v480 = vsel %vm475, %v466, 0
        %482 = vmatprep.subr.mxu0 0.0
        %483 = vmatpush1.msra.mxu0 %v467
        %484 = vmatprep.subr.mxu0 0.0
        %485 = vmatpush1.msra.mxu0 0.0
        %486 = vmatprep.subr.mxu0 0.0
        %487 = vmatpush1.msra.mxu0 0.0
        %488 = vmatprep.subr.mxu0 0.0
        %489 = vmatpush1.msra.mxu0 0.0
        %490 = vmatprep.subr.mxu0 0.0
        %491 = vmatpush1.msra.mxu0 0.0
        %492 = vmatprep.subr.mxu0 0.0
        %493 = vmatpush1.msra.mxu0 0.0
        %494 = vmatprep.subr.mxu0 0.0
        %495 = vmatpush1.msra.mxu0 0.0
        %496 = vmatprep.subr.mxu0 0.0
        %497 = vmatpush1.msra.mxu0 0.0
        %498 = vmatprep.subr.mxu0 0.0
        %499 = vmatpush1.msra.mxu0 0.0
        %500 = vmatprep.subr.mxu0 0.0
        %501 = vmatpush1.msra.mxu0 0.0
        %502 = vmatprep.subr.mxu0 0.0
        %503 = vmatpush1.msra.mxu0 0.0
        %504 = vmatprep.subr.mxu0 0.0
        %505 = vmatpush1.msra.mxu0 0.0
        %506 = vmatprep.subr.mxu0 0.0
        %507 = vmatpush1.msra.mxu0 0.0
        %508 = vmatprep.subr.mxu0 0.0
        %509 = vmatpush1.msra.mxu0 0.0
        %510 = vmatprep.subr.mxu0 0.0
        %511 = vmatpush1.msra.mxu0 0.0
        %512 = vmatprep.subr.mxu0 0.0
        %513 = vmatpush1.msra.mxu0 0.0
        %514 = vmatprep.subr.mxu0 0.0
        %515 = vmatpush1.msra.mxu0 0.0
        %516 = vmatprep.subr.mxu0 0.0
        %517 = vmatpush1.msra.mxu0 0.0
        %518 = vmatprep.subr.mxu0 0.0
        %519 = vmatpush1.msra.mxu0 0.0
        %520 = vmatprep.subr.mxu0 0.0
        %521 = vmatpush1.msra.mxu0 0.0
        %522 = vmatprep.subr.mxu0 0.0
        %523 = vmatpush1.msra.mxu0 0.0
        %524 = vmatprep.subr.mxu0 0.0
        %525 = vmatpush1.msra.mxu0 0.0
        %526 = vmatprep.subr.mxu0 0.0
        %527 = vmatpush1.msra.mxu0 0.0
        %528 = vmatprep.subr.mxu0 0.0
        %529 = vmatpush1.msra.mxu0 0.0
        %530 = vmatprep.subr.mxu0 0.0
        %531 = vmatpush1.msra.mxu0 0.0
        %532 = vmatprep.subr.mxu0 0.0
        %533 = vmatpush1.msra.mxu0 0.0
        %534 = vmatprep.subr.mxu0 0.0
        %535 = vmatpush1.msra.mxu0 0.0
        %536 = vmatprep.subr.mxu0 0.0
        %537 = vmatpush1.msra.mxu0 0.0
        %538 = vmatprep.subr.mxu0 0.0
        %539 = vmatpush1.msra.mxu0 0.0
        %540 = vmatprep.subr.mxu0 0.0
        %541 = vmatpush1.msra.mxu0 0.0
        %542 = vmatprep.subr.mxu0 0.0
        %543 = vmatpush1.msra.mxu0 0.0
        %544 = vmatprep.subr.mxu0 0.0
        %545 = vmatpush1.msra.mxu0 0.0
        %546 = vmatprep.mubr.f32.mxu0 0.0
        %547 = vmatmul.mubr.f32.gmra.mrb[0].mxu0 %v477
        %v548 = vpop.f32.mrb[0].mxu0
        %v549 = vadd.f32 %v473, %v548
        %v550 = vpop.f32.mrb[0].mxu0
        %551 = vmatprep.mubr.f32.mxu0 0.0
        %552 = vmatmul.mubr.f32.gmra.mrb[0].mxu0 %v480
        %v553 = vpop.f32.mrb[0].mxu0
        %v554 = vadd.f32 %v473, %v553
        %v555 = vpop.f32.mrb[0].mxu0
        %556 = vdwg.mxu0
        %559 = vrot.lane.b32.xlu0 %v549, 120
        %v560 = vpop.permute.xlu0 %559
        %561 = vrot.lane.b32.xlu0 %v554, 120
        %v562 = vpop.permute.xlu0 %561
        %563 = vrot.lane.b32.xlu0 %v549, 112
        %v564 = vpop.permute.xlu0 %563
        %565 = vrot.lane.b32.xlu0 %v554, 112
        %v566 = vpop.permute.xlu0 %565
        %567 = vrot.lane.b32.xlu0 %v549, 104
        %v568 = vpop.permute.xlu0 %567
        %569 = vrot.lane.b32.xlu0 %v554, 104
        %v570 = vpop.permute.xlu0 %569
        %v571 = vld [vmem:[#allocation2] sm:$0xff]
        %573 = vrot.lane.b32.xlu0 %v571, 120
        %v574 = vpop.permute.xlu0 %573
        %576 = vrot.lane.b32.xlu0 %v571, 112
        %v577 = vpop.permute.xlu0 %576
        %579 = vrot.lane.b32.xlu0 %v571, 104
        %v580 = vpop.permute.xlu0 %579
        %v582 = vsel %vm475, %v571, 0
        %v584 = vsel %vm475, %v549, 0
        %v586 = vsel %vm475, %v554, 0
        %588 = vmatprep.subr.mxu0 0.0
        %589 = vmatpush1.xpose.msra.mxu0 %v584
        %590 = vmatprep.subr.mxu0 0.0
        %591 = vmatpush1.xpose.msra.mxu0 %v586
        %592 = vmatprep.subr.mxu0 0.0
        %593 = vmatpush1.xpose.msra.mxu0 0.0
        %594 = vmatprep.subr.mxu0 0.0
        %595 = vmatpush1.xpose.msra.mxu0 0.0
        %596 = vmatprep.subr.mxu0 0.0
        %597 = vmatpush1.xpose.msra.mxu0 0.0
        %598 = vmatprep.subr.mxu0 0.0
        %599 = vmatpush1.xpose.msra.mxu0 0.0
        %600 = vmatprep.subr.mxu0 0.0
        %601 = vmatpush1.xpose.msra.mxu0 0.0
        %602 = vmatprep.subr.mxu0 0.0
        %603 = vmatpush1.xpose.msra.mxu0 0.0
        %604 = vmatprep.subr.mxu0 0.0
        %605 = vmatpush1.xpose.msra.mxu0 0.0
        %606 = vmatprep.subr.mxu0 0.0
        %607 = vmatpush1.xpose.msra.mxu0 0.0
        %608 = vmatprep.subr.mxu0 0.0
        %609 = vmatpush1.xpose.msra.mxu0 0.0
        %610 = vmatprep.subr.mxu0 0.0
        %611 = vmatpush1.xpose.msra.mxu0 0.0
        %612 = vmatprep.subr.mxu0 0.0
        %613 = vmatpush1.xpose.msra.mxu0 0.0
        %614 = vmatprep.subr.mxu0 0.0
        %615 = vmatpush1.xpose.msra.mxu0 0.0
        %616 = vmatprep.subr.mxu0 0.0
        %617 = vmatpush1.xpose.msra.mxu0 0.0
        %618 = vmatprep.subr.mxu0 0.0
        %619 = vmatpush1.xpose.msra.mxu0 0.0
        %620 = vmatprep.subr.mxu0 0.0
        %621 = vmatpush1.xpose.msra.mxu0 0.0
        %622 = vmatprep.subr.mxu0 0.0
        %623 = vmatpush1.xpose.msra.mxu0 0.0
        %624 = vmatprep.subr.mxu0 0.0
        %625 = vmatpush1.xpose.msra.mxu0 0.0
        %626 = vmatprep.subr.mxu0 0.0
        %627 = vmatpush1.xpose.msra.mxu0 0.0
        %628 = vmatprep.subr.mxu0 0.0
        %629 = vmatpush1.xpose.msra.mxu0 0.0
        %630 = vmatprep.subr.mxu0 0.0
        %631 = vmatpush1.xpose.msra.mxu0 0.0
        %632 = vmatprep.subr.mxu0 0.0
        %633 = vmatpush1.xpose.msra.mxu0 0.0
        %634 = vmatprep.subr.mxu0 0.0
        %635 = vmatpush1.xpose.msra.mxu0 0.0
        %636 = vmatprep.subr.mxu0 0.0
        %637 = vmatpush1.xpose.msra.mxu0 0.0
        %638 = vmatprep.subr.mxu0 0.0
        %639 = vmatpush1.xpose.msra.mxu0 0.0
        %640 = vmatprep.subr.mxu0 0.0
        %641 = vmatpush1.xpose.msra.mxu0 0.0
        %642 = vmatprep.subr.mxu0 0.0
        %643 = vmatpush1.xpose.msra.mxu0 0.0
        %644 = vmatprep.subr.mxu0 0.0
        %645 = vmatpush1.xpose.msra.mxu0 0.0
        %646 = vmatprep.subr.mxu0 0.0
        %647 = vmatpush1.xpose.msra.mxu0 0.0
        %648 = vmatprep.subr.mxu0 0.0
        %649 = vmatpush1.xpose.msra.mxu0 0.0
        %650 = vmatprep.subr.mxu0 0.0
        %651 = vmatpush1.xpose.msra.mxu0 0.0
        %652 = vmatprep.mubr.f32.mxu0 0.0
        %653 = vmatmul.mubr.f32.gmra.mrb[0].mxu0 %v582
        %v654 = vpop.f32.mrb[0].mxu0
        %v655 = vadd.f32 0.0, %v654
        %v656 = vpop.f32.mrb[0].mxu0
        %657 = vdwg.mxu0
        %v658 = vsel %vm475, %v574, 0
        %v660 = vsel %vm475, %v560, 0
        %v662 = vsel %vm475, %v562, 0
        %664 = vmatprep.subr.mxu0 0.0
        %665 = vmatpush1.xpose.msra.mxu0 %v660
        %666 = vmatprep.subr.mxu0 0.0
        %667 = vmatpush1.xpose.msra.mxu0 %v662
        %668 = vmatprep.subr.mxu0 0.0
        %669 = vmatpush1.xpose.msra.mxu0 0.0
        %670 = vmatprep.subr.mxu0 0.0
        %671 = vmatpush1.xpose.msra.mxu0 0.0
        %672 = vmatprep.subr.mxu0 0.0
        %673 = vmatpush1.xpose.msra.mxu0 0.0
        %674 = vmatprep.subr.mxu0 0.0
        %675 = vmatpush1.xpose.msra.mxu0 0.0
        %676 = vmatprep.subr.mxu0 0.0
        %677 = vmatpush1.xpose.msra.mxu0 0.0
        %678 = vmatprep.subr.mxu0 0.0
        %679 = vmatpush1.xpose.msra.mxu0 0.0
        %680 = vmatprep.subr.mxu0 0.0
        %681 = vmatpush1.xpose.msra.mxu0 0.0
        %682 = vmatprep.subr.mxu0 0.0
        %683 = vmatpush1.xpose.msra.mxu0 0.0
        %684 = vmatprep.subr.mxu0 0.0
        %685 = vmatpush1.xpose.msra.mxu0 0.0
        %686 = vmatprep.subr.mxu0 0.0
        %687 = vmatpush1.xpose.msra.mxu0 0.0
        %688 = vmatprep.subr.mxu0 0.0
        %689 = vmatpush1.xpose.msra.mxu0 0.0
        %690 = vmatprep.subr.mxu0 0.0
        %691 = vmatpush1.xpose.msra.mxu0 0.0
        %692 = vmatprep.subr.mxu0 0.0
        %693 = vmatpush1.xpose.msra.mxu0 0.0
        %694 = vmatprep.subr.mxu0 0.0
        %695 = vmatpush1.xpose.msra.mxu0 0.0
        %696 = vmatprep.subr.mxu0 0.0
        %697 = vmatpush1.xpose.msra.mxu0 0.0
        %698 = vmatprep.subr.mxu0 0.0
        %699 = vmatpush1.xpose.msra.mxu0 0.0
        %700 = vmatprep.subr.mxu0 0.0
        %701 = vmatpush1.xpose.msra.mxu0 0.0
        %702 = vmatprep.subr.mxu0 0.0
        %703 = vmatpush1.xpose.msra.mxu0 0.0
        %704 = vmatprep.subr.mxu0 0.0
        %705 = vmatpush1.xpose.msra.mxu0 0.0
        %706 = vmatprep.subr.mxu0 0.0
        %707 = vmatpush1.xpose.msra.mxu0 0.0
        %708 = vmatprep.subr.mxu0 0.0
        %709 = vmatpush1.xpose.msra.mxu0 0.0
        %710 = vmatprep.subr.mxu0 0.0
        %711 = vmatpush1.xpose.msra.mxu0 0.0
        %712 = vmatprep.subr.mxu0 0.0
        %713 = vmatpush1.xpose.msra.mxu0 0.0
        %714 = vmatprep.subr.mxu0 0.0
        %715 = vmatpush1.xpose.msra.mxu0 0.0
        %716 = vmatprep.subr.mxu0 0.0
        %717 = vmatpush1.xpose.msra.mxu0 0.0
        %718 = vmatprep.subr.mxu0 0.0
        %719 = vmatpush1.xpose.msra.mxu0 0.0
        %720 = vmatprep.subr.mxu0 0.0
        %721 = vmatpush1.xpose.msra.mxu0 0.0
        %722 = vmatprep.subr.mxu0 0.0
        %723 = vmatpush1.xpose.msra.mxu0 0.0
        %724 = vmatprep.subr.mxu0 0.0
        %725 = vmatpush1.xpose.msra.mxu0 0.0
        %726 = vmatprep.subr.mxu0 0.0
        %727 = vmatpush1.xpose.msra.mxu0 0.0
        %728 = vmatprep.mubr.f32.mxu0 0.0
        %729 = vmatmul.mubr.f32.gmra.mrb[0].mxu0 %v658
        %v730 = vpop.f32.mrb[0].mxu0
        %v731 = vadd.f32 0.0, %v730
        %v732 = vpop.f32.mrb[0].mxu0
        %733 = vdwg.mxu0
        %v734 = vsel %vm475, %v577, 0
        %v736 = vsel %vm475, %v564, 0
        %v738 = vsel %vm475, %v566, 0
        %740 = vmatprep.subr.mxu0 0.0
        %741 = vmatpush1.xpose.msra.mxu0 %v736
        %742 = vmatprep.subr.mxu0 0.0
        %743 = vmatpush1.xpose.msra.mxu0 %v738
        %744 = vmatprep.subr.mxu0 0.0
        %745 = vmatpush1.xpose.msra.mxu0 0.0
        %746 = vmatprep.subr.mxu0 0.0
        %747 = vmatpush1.xpose.msra.mxu0 0.0
        %748 = vmatprep.subr.mxu0 0.0
        %749 = vmatpush1.xpose.msra.mxu0 0.0
        %750 = vmatprep.subr.mxu0 0.0
        %751 = vmatpush1.xpose.msra.mxu0 0.0
        %752 = vmatprep.subr.mxu0 0.0
        %753 = vmatpush1.xpose.msra.mxu0 0.0
        %754 = vmatprep.subr.mxu0 0.0
        %755 = vmatpush1.xpose.msra.mxu0 0.0
        %756 = vmatprep.subr.mxu0 0.0
        %757 = vmatpush1.xpose.msra.mxu0 0.0
        %758 = vmatprep.subr.mxu0 0.0
        %759 = vmatpush1.xpose.msra.mxu0 0.0
        %760 = vmatprep.subr.mxu0 0.0
        %761 = vmatpush1.xpose.msra.mxu0 0.0
        %762 = vmatprep.subr.mxu0 0.0
        %763 = vmatpush1.xpose.msra.mxu0 0.0
        %764 = vmatprep.subr.mxu0 0.0
        %765 = vmatpush1.xpose.msra.mxu0 0.0
        %766 = vmatprep.subr.mxu0 0.0
        %767 = vmatpush1.xpose.msra.mxu0 0.0
        %768 = vmatprep.subr.mxu0 0.0
        %769 = vmatpush1.xpose.msra.mxu0 0.0
        %770 = vmatprep.subr.mxu0 0.0
        %771 = vmatpush1.xpose.msra.mxu0 0.0
        %772 = vmatprep.subr.mxu0 0.0
        %773 = vmatpush1.xpose.msra.mxu0 0.0
        %774 = vmatprep.subr.mxu0 0.0
        %775 = vmatpush1.xpose.msra.mxu0 0.0
        %776 = vmatprep.subr.mxu0 0.0
        %777 = vmatpush1.xpose.msra.mxu0 0.0
        %778 = vmatprep.subr.mxu0 0.0
        %779 = vmatpush1.xpose.msra.mxu0 0.0
        %780 = vmatprep.subr.mxu0 0.0
        %781 = vmatpush1.xpose.msra.mxu0 0.0
        %782 = vmatprep.subr.mxu0 0.0
        %783 = vmatpush1.xpose.msra.mxu0 0.0
        %784 = vmatprep.subr.mxu0 0.0
        %785 = vmatpush1.xpose.msra.mxu0 0.0
        %786 = vmatprep.subr.mxu0 0.0
        %787 = vmatpush1.xpose.msra.mxu0 0.0
        %788 = vmatprep.subr.mxu0 0.0
        %789 = vmatpush1.xpose.msra.mxu0 0.0
        %790 = vmatprep.subr.mxu0 0.0
        %791 = vmatpush1.xpose.msra.mxu0 0.0
        %792 = vmatprep.subr.mxu0 0.0
        %793 = vmatpush1.xpose.msra.mxu0 0.0
        %794 = vmatprep.subr.mxu0 0.0
        %795 = vmatpush1.xpose.msra.mxu0 0.0
        %796 = vmatprep.subr.mxu0 0.0
        %797 = vmatpush1.xpose.msra.mxu0 0.0
        %798 = vmatprep.subr.mxu0 0.0
        %799 = vmatpush1.xpose.msra.mxu0 0.0
        %800 = vmatprep.subr.mxu0 0.0
        %801 = vmatpush1.xpose.msra.mxu0 0.0
        %802 = vmatprep.subr.mxu0 0.0
        %803 = vmatpush1.xpose.msra.mxu0 0.0
        %804 = vmatprep.mubr.f32.mxu0 0.0
        %805 = vmatmul.mubr.f32.gmra.mrb[0].mxu0 %v734
        %v806 = vpop.f32.mrb[0].mxu0
        %v807 = vadd.f32 0.0, %v806
        %v808 = vpop.f32.mrb[0].mxu0
        %809 = vdwg.mxu0
        %v810 = vsel %vm475, %v580, 0
        %v812 = vsel %vm475, %v568, 0
        %v814 = vsel %vm475, %v570, 0
        %816 = vmatprep.subr.mxu0 0.0
        %817 = vmatpush1.xpose.msra.mxu0 %v812
        %818 = vmatprep.subr.mxu0 0.0
        %819 = vmatpush1.xpose.msra.mxu0 %v814
        %820 = vmatprep.subr.mxu0 0.0
        %821 = vmatpush1.xpose.msra.mxu0 0.0
        %822 = vmatprep.subr.mxu0 0.0
        %823 = vmatpush1.xpose.msra.mxu0 0.0
        %824 = vmatprep.subr.mxu0 0.0
        %825 = vmatpush1.xpose.msra.mxu0 0.0
        %826 = vmatprep.subr.mxu0 0.0
        %827 = vmatpush1.xpose.msra.mxu0 0.0
        %828 = vmatprep.subr.mxu0 0.0
        %829 = vmatpush1.xpose.msra.mxu0 0.0
        %830 = vmatprep.subr.mxu0 0.0
        %831 = vmatpush1.xpose.msra.mxu0 0.0
        %832 = vmatprep.subr.mxu0 0.0
        %833 = vmatpush1.xpose.msra.mxu0 0.0
        %834 = vmatprep.subr.mxu0 0.0
        %835 = vmatpush1.xpose.msra.mxu0 0.0
        %836 = vmatprep.subr.mxu0 0.0
        %837 = vmatpush1.xpose.msra.mxu0 0.0
        %838 = vmatprep.subr.mxu0 0.0
        %839 = vmatpush1.xpose.msra.mxu0 0.0
        %840 = vmatprep.subr.mxu0 0.0
        %841 = vmatpush1.xpose.msra.mxu0 0.0
        %842 = vmatprep.subr.mxu0 0.0
        %843 = vmatpush1.xpose.msra.mxu0 0.0
        %844 = vmatprep.subr.mxu0 0.0
        %845 = vmatpush1.xpose.msra.mxu0 0.0
        %846 = vmatprep.subr.mxu0 0.0
        %847 = vmatpush1.xpose.msra.mxu0 0.0
        %848 = vmatprep.subr.mxu0 0.0
        %849 = vmatpush1.xpose.msra.mxu0 0.0
        %850 = vmatprep.subr.mxu0 0.0
        %851 = vmatpush1.xpose.msra.mxu0 0.0
        %852 = vmatprep.subr.mxu0 0.0
        %853 = vmatpush1.xpose.msra.mxu0 0.0
        %854 = vmatprep.subr.mxu0 0.0
        %855 = vmatpush1.xpose.msra.mxu0 0.0
        %856 = vmatprep.subr.mxu0 0.0
        %857 = vmatpush1.xpose.msra.mxu0 0.0
        %858 = vmatprep.subr.mxu0 0.0
        %859 = vmatpush1.xpose.msra.mxu0 0.0
        %860 = vmatprep.subr.mxu0 0.0
        %861 = vmatpush1.xpose.msra.mxu0 0.0
        %862 = vmatprep.subr.mxu0 0.0
        %863 = vmatpush1.xpose.msra.mxu0 0.0
        %864 = vmatprep.subr.mxu0 0.0
        %865 = vmatpush1.xpose.msra.mxu0 0.0
        %866 = vmatprep.subr.mxu0 0.0
        %867 = vmatpush1.xpose.msra.mxu0 0.0
        %868 = vmatprep.subr.mxu0 0.0
        %869 = vmatpush1.xpose.msra.mxu0 0.0
        %870 = vmatprep.subr.mxu0 0.0
        %871 = vmatpush1.xpose.msra.mxu0 0.0
        %872 = vmatprep.subr.mxu0 0.0
        %873 = vmatpush1.xpose.msra.mxu0 0.0
        %874 = vmatprep.subr.mxu0 0.0
        %875 = vmatpush1.xpose.msra.mxu0 0.0
        %876 = vmatprep.subr.mxu0 0.0
        %877 = vmatpush1.xpose.msra.mxu0 0.0
        %878 = vmatprep.subr.mxu0 0.0
        %879 = vmatpush1.xpose.msra.mxu0 0.0
        %880 = vmatprep.mubr.f32.mxu0 0.0
        %881 = vmatmul.mubr.f32.gmra.mrb[0].mxu0 %v810
        %v882 = vpop.f32.mrb[0].mxu0
        %v883 = vadd.f32 0.0, %v882
        %v884 = vpop.f32.mrb[0].mxu0
        %885 = vdwg.mxu0
        %vm886 = vcmask 130048
        %v887 = vsel %vm886, %v655, -inf
        %888 = vmax.xlane.f32.xlu0 %v887
        %v889 = vpop.xlane.xlu0 %888
        %v890 = vsel %vm886, %v731, -inf
        %891 = vmax.xlane.f32.xlu0 %v890
        %v892 = vpop.xlane.xlu0 %891
        %v893 = vsel %vm886, %v807, -inf
        %894 = vmax.xlane.f32.xlu0 %v893
        %v895 = vpop.xlane.xlu0 %894
        %v896 = vsel %vm886, %v883, -inf
        %897 = vmax.xlane.f32.xlu0 %v896
        %v898 = vpop.xlane.xlu0 %897
        %v899 = vsub.f32 %v655, %v889
        %v900 = vsub.f32 %v731, %v892
        %v901 = vsub.f32 %v807, %v895
        %v902 = vsub.f32 %v883, %v898
        %v903 = vmul.f32 %v899, 1.442695
        %v904 = vpow.pop %v903
        %v905 = vmul.f32 %v900, 1.442695
        %v906 = vpow.pop %v905
        %v907 = vmul.f32 %v901, 1.442695
        %v908 = vpow.pop %v907
        %v909 = vmul.f32 %v902, 1.442695
        %v910 = vpow.pop %v909
        %v911 = vsel %vm886, %v904, 0.0
        %912 = vadd.xlane.f32.xlu0 %v911
        %v913 = vpop.xlane.xlu0 %912
        %v914 = vsel %vm886, %v906, 0.0
        %915 = vadd.xlane.f32.xlu0 %v914
        %v916 = vpop.xlane.xlu0 %915
        %v917 = vsel %vm886, %v908, 0.0
        %918 = vadd.xlane.f32.xlu0 %v917
        %v919 = vpop.xlane.xlu0 %918
        %v920 = vsel %vm886, %v910, 0.0
        %921 = vadd.xlane.f32.xlu0 %v920
        %v922 = vpop.xlane.xlu0 %921
        %v923 = vrcp.pop %v913
        %v924 = vrcp.pop %v916
        %v925 = vrcp.pop %v919
        %v926 = vrcp.pop %v922
        %v927 = vmul.f32 %v904, %v923
        %v928 = vmul.f32 %v906, %v924
        %v929 = vmul.f32 %v908, %v925
        %v930 = vmul.f32 %v910, %v926
        %931 = vrot.lane.b32.xlu0 %v549, 96
        %v932 = vpop.permute.xlu0 %931
        %933 = vrot.lane.b32.xlu0 %v554, 96
        %v934 = vpop.permute.xlu0 %933
        %v938 = vsel %vm886, %v927, 0
        %940 = vmatprep.subr.mxu0 0.0
        %941 = vmatpush1.msra.mxu0 %v932
        %942 = vmatprep.subr.mxu0 0.0
        %943 = vmatpush1.msra.mxu0 %v934
        %944 = vmatprep.subr.mxu0 0.0
        %945 = vmatpush1.msra.mxu0 0.0
        %946 = vmatprep.subr.mxu0 0.0
        %947 = vmatpush1.msra.mxu0 0.0
        %948 = vmatprep.subr.mxu0 0.0
        %949 = vmatpush1.msra.mxu0 0.0
        %950 = vmatprep.subr.mxu0 0.0
        %951 = vmatpush1.msra.mxu0 0.0
        %952 = vmatprep.subr.mxu0 0.0
        %953 = vmatpush1.msra.mxu0 0.0
        %954 = vmatprep.subr.mxu0 0.0
        %955 = vmatpush1.msra.mxu0 0.0
        %956 = vmatprep.subr.mxu0 0.0
        %957 = vmatpush1.msra.mxu0 0.0
        %958 = vmatprep.subr.mxu0 0.0
        %959 = vmatpush1.msra.mxu0 0.0
        %960 = vmatprep.subr.mxu0 0.0
        %961 = vmatpush1.msra.mxu0 0.0
        %962 = vmatprep.subr.mxu0 0.0
        %963 = vmatpush1.msra.mxu0 0.0
        %964 = vmatprep.subr.mxu0 0.0
        %965 = vmatpush1.msra.mxu0 0.0
        %966 = vmatprep.subr.mxu0 0.0
        %967 = vmatpush1.msra.mxu0 0.0
        %968 = vmatprep.subr.mxu0 0.0
        %969 = vmatpush1.msra.mxu0 0.0
        %970 = vmatprep.subr.mxu0 0.0
        %971 = vmatpush1.msra.mxu0 0.0
        %972 = vmatprep.subr.mxu0 0.0
        %973 = vmatpush1.msra.mxu0 0.0
        %974 = vmatprep.subr.mxu0 0.0
        %975 = vmatpush1.msra.mxu0 0.0
        %976 = vmatprep.subr.mxu0 0.0
        %977 = vmatpush1.msra.mxu0 0.0
        %978 = vmatprep.subr.mxu0 0.0
        %979 = vmatpush1.msra.mxu0 0.0
        %980 = vmatprep.subr.mxu0 0.0
        %981 = vmatpush1.msra.mxu0 0.0
        %982 = vmatprep.subr.mxu0 0.0
        %983 = vmatpush1.msra.mxu0 0.0
        %984 = vmatprep.subr.mxu0 0.0
        %985 = vmatpush1.msra.mxu0 0.0
        %986 = vmatprep.subr.mxu0 0.0
        %987 = vmatpush1.msra.mxu0 0.0
        %988 = vmatprep.subr.mxu0 0.0
        %989 = vmatpush1.msra.mxu0 0.0
        %990 = vmatprep.subr.mxu0 0.0
        %991 = vmatpush1.msra.mxu0 0.0
        %992 = vmatprep.subr.mxu0 0.0
        %993 = vmatpush1.msra.mxu0 0.0
        %994 = vmatprep.subr.mxu0 0.0
        %995 = vmatpush1.msra.mxu0 0.0
        %996 = vmatprep.subr.mxu0 0.0
        %997 = vmatpush1.msra.mxu0 0.0
        %998 = vmatprep.subr.mxu0 0.0
        %999 = vmatpush1.msra.mxu0 0.0
        %1000 = vmatprep.subr.mxu0 0.0
        %1001 = vmatpush1.msra.mxu0 0.0
        %1002 = vmatprep.subr.mxu0 0.0
        %1003 = vmatpush1.msra.mxu0 0.0
        %1004 = vmatprep.mubr.f32.mxu0 0.0
        %1005 = vmatmul.mubr.f32.gmra.mrb[0].mxu0 %v938
        %v1006 = vpop.f32.mrb[0].mxu0
        %v1007 = vadd.f32 0.0, %v1006
        %v1008 = vpop.f32.mrb[0].mxu0
        %1009 = vdwg.mxu0
        %1010 = vrot.lane.b32.xlu0 %v560, 96
        %v1011 = vpop.permute.xlu0 %1010
        %1012 = vrot.lane.b32.xlu0 %v562, 96
        %v1013 = vpop.permute.xlu0 %1012
        %v1017 = vsel %vm886, %v928, 0
        %1019 = vmatprep.subr.mxu0 0.0
        %1020 = vmatpush1.msra.mxu0 %v1011
        %1021 = vmatprep.subr.mxu0 0.0
        %1022 = vmatpush1.msra.mxu0 %v1013
        %1023 = vmatprep.subr.mxu0 0.0
        %1024 = vmatpush1.msra.mxu0 0.0
        %1025 = vmatprep.subr.mxu0 0.0
        %1026 = vmatpush1.msra.mxu0 0.0
        %1027 = vmatprep.subr.mxu0 0.0
        %1028 = vmatpush1.msra.mxu0 0.0
        %1029 = vmatprep.subr.mxu0 0.0
        %1030 = vmatpush1.msra.mxu0 0.0
        %1031 = vmatprep.subr.mxu0 0.0
        %1032 = vmatpush1.msra.mxu0 0.0
        %1033 = vmatprep.subr.mxu0 0.0
        %1034 = vmatpush1.msra.mxu0 0.0
        %1035 = vmatprep.subr.mxu0 0.0
        %1036 = vmatpush1.msra.mxu0 0.0
        %1037 = vmatprep.subr.mxu0 0.0
        %1038 = vmatpush1.msra.mxu0 0.0
        %1039 = vmatprep.subr.mxu0 0.0
        %1040 = vmatpush1.msra.mxu0 0.0
        %1041 = vmatprep.subr.mxu0 0.0
        %1042 = vmatpush1.msra.mxu0 0.0
        %1043 = vmatprep.subr.mxu0 0.0
        %1044 = vmatpush1.msra.mxu0 0.0
        %1045 = vmatprep.subr.mxu0 0.0
        %1046 = vmatpush1.msra.mxu0 0.0
        %1047 = vmatprep.subr.mxu0 0.0
        %1048 = vmatpush1.msra.mxu0 0.0
        %1049 = vmatprep.subr.mxu0 0.0
        %1050 = vmatpush1.msra.mxu0 0.0
        %1051 = vmatprep.subr.mxu0 0.0
        %1052 = vmatpush1.msra.mxu0 0.0
        %1053 = vmatprep.subr.mxu0 0.0
        %1054 = vmatpush1.msra.mxu0 0.0
        %1055 = vmatprep.subr.mxu0 0.0
        %1056 = vmatpush1.msra.mxu0 0.0
        %1057 = vmatprep.subr.mxu0 0.0
        %1058 = vmatpush1.msra.mxu0 0.0
        %1059 = vmatprep.subr.mxu0 0.0
        %1060 = vmatpush1.msra.mxu0 0.0
        %1061 = vmatprep.subr.mxu0 0.0
        %1062 = vmatpush1.msra.mxu0 0.0
        %1063 = vmatprep.subr.mxu0 0.0
        %1064 = vmatpush1.msra.mxu0 0.0
        %1065 = vmatprep.subr.mxu0 0.0
        %1066 = vmatpush1.msra.mxu0 0.0
        %1067 = vmatprep.subr.mxu0 0.0
        %1068 = vmatpush1.msra.mxu0 0.0
        %1069 = vmatprep.subr.mxu0 0.0
        %1070 = vmatpush1.msra.mxu0 0.0
        %1071 = vmatprep.subr.mxu0 0.0
        %1072 = vmatpush1.msra.mxu0 0.0
        %1073 = vmatprep.subr.mxu0 0.0
        %1074 = vmatpush1.msra.mxu0 0.0
        %1075 = vmatprep.subr.mxu0 0.0
        %1076 = vmatpush1.msra.mxu0 0.0
        %1077 = vmatprep.subr.mxu0 0.0
        %1078 = vmatpush1.msra.mxu0 0.0
        %1079 = vmatprep.subr.mxu0 0.0
        %1080 = vmatpush1.msra.mxu0 0.0
        %1081 = vmatprep.subr.mxu0 0.0
        %1082 = vmatpush1.msra.mxu0 0.0
        %1083 = vmatprep.mubr.f32.mxu0 0.0
        %1084 = vmatmul.mubr.f32.gmra.mrb[0].mxu0 %v1017
        %v1085 = vpop.f32.mrb[0].mxu0
        %v1086 = vadd.f32 0.0, %v1085
        %v1087 = vpop.f32.mrb[0].mxu0
        %1088 = vdwg.mxu0
        %1089 = vrot.lane.b32.xlu0 %v564, 96
        %v1090 = vpop.permute.xlu0 %1089
        %1091 = vrot.lane.b32.xlu0 %v566, 96
        %v1092 = vpop.permute.xlu0 %1091
        %v1096 = vsel %vm886, %v929, 0
        %1098 = vmatprep.subr.mxu0 0.0
        %1099 = vmatpush1.msra.mxu0 %v1090
        %1100 = vmatprep.subr.mxu0 0.0
        %1101 = vmatpush1.msra.mxu0 %v1092
        %1102 = vmatprep.subr.mxu0 0.0
        %1103 = vmatpush1.msra.mxu0 0.0
        %1104 = vmatprep.subr.mxu0 0.0
        %1105 = vmatpush1.msra.mxu0 0.0
        %1106 = vmatprep.subr.mxu0 0.0
        %1107 = vmatpush1.msra.mxu0 0.0
        %1108 = vmatprep.subr.mxu0 0.0
        %1109 = vmatpush1.msra.mxu0 0.0
        %1110 = vmatprep.subr.mxu0 0.0
        %1111 = vmatpush1.msra.mxu0 0.0
        %1112 = vmatprep.subr.mxu0 0.0
        %1113 = vmatpush1.msra.mxu0 0.0
        %1114 = vmatprep.subr.mxu0 0.0
        %1115 = vmatpush1.msra.mxu0 0.0
        %1116 = vmatprep.subr.mxu0 0.0
        %1117 = vmatpush1.msra.mxu0 0.0
        %1118 = vmatprep.subr.mxu0 0.0
        %1119 = vmatpush1.msra.mxu0 0.0
        %1120 = vmatprep.subr.mxu0 0.0
        %1121 = vmatpush1.msra.mxu0 0.0
        %1122 = vmatprep.subr.mxu0 0.0
        %1123 = vmatpush1.msra.mxu0 0.0
        %1124 = vmatprep.subr.mxu0 0.0
        %1125 = vmatpush1.msra.mxu0 0.0
        %1126 = vmatprep.subr.mxu0 0.0
        %1127 = vmatpush1.msra.mxu0 0.0
        %1128 = vmatprep.subr.mxu0 0.0
        %1129 = vmatpush1.msra.mxu0 0.0
        %1130 = vmatprep.subr.mxu0 0.0
        %1131 = vmatpush1.msra.mxu0 0.0
        %1132 = vmatprep.subr.mxu0 0.0
        %1133 = vmatpush1.msra.mxu0 0.0
        %1134 = vmatprep.subr.mxu0 0.0
        %1135 = vmatpush1.msra.mxu0 0.0
        %1136 = vmatprep.subr.mxu0 0.0
        %1137 = vmatpush1.msra.mxu0 0.0
        %1138 = vmatprep.subr.mxu0 0.0
        %1139 = vmatpush1.msra.mxu0 0.0
        %1140 = vmatprep.subr.mxu0 0.0
        %1141 = vmatpush1.msra.mxu0 0.0
        %1142 = vmatprep.subr.mxu0 0.0
        %1143 = vmatpush1.msra.mxu0 0.0
        %1144 = vmatprep.subr.mxu0 0.0
        %1145 = vmatpush1.msra.mxu0 0.0
        %1146 = vmatprep.subr.mxu0 0.0
        %1147 = vmatpush1.msra.mxu0 0.0
        %1148 = vmatprep.subr.mxu0 0.0
        %1149 = vmatpush1.msra.mxu0 0.0
        %1150 = vmatprep.subr.mxu0 0.0
        %1151 = vmatpush1.msra.mxu0 0.0
        %1152 = vmatprep.subr.mxu0 0.0
        %1153 = vmatpush1.msra.mxu0 0.0
        %1154 = vmatprep.subr.mxu0 0.0
        %1155 = vmatpush1.msra.mxu0 0.0
        %1156 = vmatprep.subr.mxu0 0.0
        %1157 = vmatpush1.msra.mxu0 0.0
        %1158 = vmatprep.subr.mxu0 0.0
        %1159 = vmatpush1.msra.mxu0 0.0
        %1160 = vmatprep.subr.mxu0 0.0
        %1161 = vmatpush1.msra.mxu0 0.0
        %1162 = vmatprep.mubr.f32.mxu0 0.0
        %1163 = vmatmul.mubr.f32.gmra.mrb[0].mxu0 %v1096
        %v1164 = vpop.f32.mrb[0].mxu0
        %v1165 = vadd.f32 0.0, %v1164
        %v1166 = vpop.f32.mrb[0].mxu0
        %1167 = vdwg.mxu0
        %1168 = vrot.lane.b32.xlu0 %v568, 96
        %v1169 = vpop.permute.xlu0 %1168
        %1170 = vrot.lane.b32.xlu0 %v570, 96
        %v1171 = vpop.permute.xlu0 %1170
        %v1175 = vsel %vm886, %v930, 0
        %1177 = vmatprep.subr.mxu0 0.0
        %1178 = vmatpush1.msra.mxu0 %v1169
        %1179 = vmatprep.subr.mxu0 0.0
        %1180 = vmatpush1.msra.mxu0 %v1171
        %1181 = vmatprep.subr.mxu0 0.0
        %1182 = vmatpush1.msra.mxu0 0.0
        %1183 = vmatprep.subr.mxu0 0.0
        %1184 = vmatpush1.msra.mxu0 0.0
        %1185 = vmatprep.subr.mxu0 0.0
        %1186 = vmatpush1.msra.mxu0 0.0
        %1187 = vmatprep.subr.mxu0 0.0
        %1188 = vmatpush1.msra.mxu0 0.0
        %1189 = vmatprep.subr.mxu0 0.0
        %1190 = vmatpush1.msra.mxu0 0.0
        %1191 = vmatprep.subr.mxu0 0.0
        %1192 = vmatpush1.msra.mxu0 0.0
        %1193 = vmatprep.subr.mxu0 0.0
        %1194 = vmatpush1.msra.mxu0 0.0
        %1195 = vmatprep.subr.mxu0 0.0
        %1196 = vmatpush1.msra.mxu0 0.0
        %1197 = vmatprep.subr.mxu0 0.0
        %1198 = vmatpush1.msra.mxu0 0.0
        %1199 = vmatprep.subr.mxu0 0.0
        %1200 = vmatpush1.msra.mxu0 0.0
        %1201 = vmatprep.subr.mxu0 0.0
        %1202 = vmatpush1.msra.mxu0 0.0
        %1203 = vmatprep.subr.mxu0 0.0
        %1204 = vmatpush1.msra.mxu0 0.0
        %1205 = vmatprep.subr.mxu0 0.0
        %1206 = vmatpush1.msra.mxu0 0.0
        %1207 = vmatprep.subr.mxu0 0.0
        %1208 = vmatpush1.msra.mxu0 0.0
        %1209 = vmatprep.subr.mxu0 0.0
        %1210 = vmatpush1.msra.mxu0 0.0
        %1211 = vmatprep.subr.mxu0 0.0
        %1212 = vmatpush1.msra.mxu0 0.0
        %1213 = vmatprep.subr.mxu0 0.0
        %1214 = vmatpush1.msra.mxu0 0.0
        %1215 = vmatprep.subr.mxu0 0.0
        %1216 = vmatpush1.msra.mxu0 0.0
        %1217 = vmatprep.subr.mxu0 0.0
        %1218 = vmatpush1.msra.mxu0 0.0
        %1219 = vmatprep.subr.mxu0 0.0
        %1220 = vmatpush1.msra.mxu0 0.0
        %1221 = vmatprep.subr.mxu0 0.0
        %1222 = vmatpush1.msra.mxu0 0.0
        %1223 = vmatprep.subr.mxu0 0.0
        %1224 = vmatpush1.msra.mxu0 0.0
        %1225 = vmatprep.subr.mxu0 0.0
        %1226 = vmatpush1.msra.mxu0 0.0
        %1227 = vmatprep.subr.mxu0 0.0
        %1228 = vmatpush1.msra.mxu0 0.0
        %1229 = vmatprep.subr.mxu0 0.0
        %1230 = vmatpush1.msra.mxu0 0.0
        %1231 = vmatprep.subr.mxu0 0.0
        %1232 = vmatpush1.msra.mxu0 0.0
        %1233 = vmatprep.subr.mxu0 0.0
        %1234 = vmatpush1.msra.mxu0 0.0
        %1235 = vmatprep.subr.mxu0 0.0
        %1236 = vmatpush1.msra.mxu0 0.0
        %1237 = vmatprep.subr.mxu0 0.0
        %1238 = vmatpush1.msra.mxu0 0.0
        %1239 = vmatprep.subr.mxu0 0.0
        %1240 = vmatpush1.msra.mxu0 0.0
        %1241 = vmatprep.mubr.f32.mxu0 0.0
        %1242 = vmatmul.mubr.f32.gmra.mrb[0].mxu0 %v1175
        %v1243 = vpop.f32.mrb[0].mxu0
        %v1244 = vadd.f32 0.0, %v1243
        %v1245 = vpop.f32.mrb[0].mxu0
        %1246 = vdwg.mxu0
        %v1247 = vadd.f32 %v571, %v1007
        %v1248 = vadd.f32 %v574, %v1086
        %v1249 = vadd.f32 %v577, %v1165
        %v1250 = vadd.f32 %v580, %v1244
        %1252 = vrot.lane.b32.xlu0 %v1248, 8
        %v1253 = vpop.permute.xlu0 %1252
        %1256 = vrot.lane.b32.xlu0 %v1249, 16
        %v1257 = vpop.permute.xlu0 %1256
        %1260 = vrot.lane.b32.xlu0 %v1250, 24
        %v1261 = vpop.permute.xlu0 %1260
        %v1263 = vsel %vm475, %v1247, %v1253
        %v1264 = vsel %vm886, %v1263, %v1257
        %vm1265 = vcmask 195584
        %v1266 = vsel %vm1265, %v1264, %v1261
        %v1267 = vld [vmem:[%s4] sm:$0xff]
        %v1268 = vld [vmem:[%s4 + $0x8] sm:$0xff]
        %v1269 = vld [vmem:[%s4 + $0x10] sm:$0xff]
        %v1270 = vld [vmem:[%s4 + $0x18] sm:$0xff]
        %v1271 = vld [vmem:[%s5] sm:$0x1]
        %v1273 = vlaneseq
        %v1274 = vshrl.u32 %v1273, 7
        %v1275 = vsub.s32 0, %v1274
        %v1276 = vrot.slane %v1271, %v1275
        %vm1278 = vcmask 261120
        %v1280 = vsel %vm1278, %v1266, 0
        %1282 = vmatprep.subr.mxu0 0.0
        %1283 = vmatpush1.msra.mxu0 %v1267
        %1284 = vmatprep.subr.mxu0 0.0
        %1285 = vmatpush1.msra.mxu0 %v1268
        %1286 = vmatprep.subr.mxu0 0.0
        %1287 = vmatpush1.msra.mxu0 %v1269
        %1288 = vmatprep.subr.mxu0 0.0
        %1289 = vmatpush1.msra.mxu0 %v1270
        %1290 = vmatprep.subr.mxu0 0.0
        %1291 = vmatpush1.msra.mxu0 0.0
        %1292 = vmatprep.subr.mxu0 0.0
        %1293 = vmatpush1.msra.mxu0 0.0
        %1294 = vmatprep.subr.mxu0 0.0
        %1295 = vmatpush1.msra.mxu0 0.0
        %1296 = vmatprep.subr.mxu0 0.0
        %1297 = vmatpush1.msra.mxu0 0.0
        %1298 = vmatprep.subr.mxu0 0.0
        %1299 = vmatpush1.msra.mxu0 0.0
        %1300 = vmatprep.subr.mxu0 0.0
        %1301 = vmatpush1.msra.mxu0 0.0
        %1302 = vmatprep.subr.mxu0 0.0
        %1303 = vmatpush1.msra.mxu0 0.0
        %1304 = vmatprep.subr.mxu0 0.0
        %1305 = vmatpush1.msra.mxu0 0.0
        %1306 = vmatprep.subr.mxu0 0.0
        %1307 = vmatpush1.msra.mxu0 0.0
        %1308 = vmatprep.subr.mxu0 0.0
        %1309 = vmatpush1.msra.mxu0 0.0
        %1310 = vmatprep.subr.mxu0 0.0
        %1311 = vmatpush1.msra.mxu0 0.0
        %1312 = vmatprep.subr.mxu0 0.0
        %1313 = vmatpush1.msra.mxu0 0.0
        %1314 = vmatprep.subr.mxu0 0.0
        %1315 = vmatpush1.msra.mxu0 0.0
        %1316 = vmatprep.subr.mxu0 0.0
        %1317 = vmatpush1.msra.mxu0 0.0
        %1318 = vmatprep.subr.mxu0 0.0
        %1319 = vmatpush1.msra.mxu0 0.0
        %1320 = vmatprep.subr.mxu0 0.0
        %1321 = vmatpush1.msra.mxu0 0.0
        %1322 = vmatprep.subr.mxu0 0.0
        %1323 = vmatpush1.msra.mxu0 0.0
        %1324 = vmatprep.subr.mxu0 0.0
        %1325 = vmatpush1.msra.mxu0 0.0
        %1326 = vmatprep.subr.mxu0 0.0
        %1327 = vmatpush1.msra.mxu0 0.0
        %1328 = vmatprep.subr.mxu0 0.0
        %1329 = vmatpush1.msra.mxu0 0.0
        %1330 = vmatprep.subr.mxu0 0.0
        %1331 = vmatpush1.msra.mxu0 0.0
        %1332 = vmatprep.subr.mxu0 0.0
        %1333 = vmatpush1.msra.mxu0 0.0
        %1334 = vmatprep.subr.mxu0 0.0
        %1335 = vmatpush1.msra.mxu0 0.0
        %1336 = vmatprep.subr.mxu0 0.0
        %1337 = vmatpush1.msra.mxu0 0.0
        %1338 = vmatprep.subr.mxu0 0.0
        %1339 = vmatpush1.msra.mxu0 0.0
        %1340 = vmatprep.subr.mxu0 0.0
        %1341 = vmatpush1.msra.mxu0 0.0
        %1342 = vmatprep.subr.mxu0 0.0
        %1343 = vmatpush1.msra.mxu0 0.0
        %1344 = vmatprep.subr.mxu0 0.0
        %1345 = vmatpush1.msra.mxu0 0.0
        %1346 = vmatprep.mubr.f32.mxu0 0.0
        %1347 = vmatmul.mubr.f32.gmra.mrb[0].mxu0 %v1280
        %v1348 = vpop.f32.mrb[0].mxu0
        %v1349 = vadd.f32 %v1276, %v1348
        %v1350 = vpop.f32.mrb[0].mxu0
        %1351 = vdwg.mxu0
        %v1352 = vmax.f32 %v1349, 0.0
        %v1353 = vadd.f32 %v1266, %v1352
        %v1354 = vld [vmem:[#allocation7] sm:$0xff]
        %v1355 = vld [vmem:[%s7] sm:$0x1]
        %v1357 = vlaneseq
        %v1358 = vshrl.u32 %v1357, 7
        %v1359 = vsub.s32 0, %v1358
        %v1360 = vrot.slane %v1355, %v1359
        %1362 = vmatprep.subr.mxu0 0.0
        %1363 = vmatpush1.msra.mxu0 %v1354
        %1364 = vmatprep.subr.mxu0 0.0
        %1365 = vmatpush1.msra.mxu0 0.0
        %1366 = vmatprep.subr.mxu0 0.0
        %1367 = vmatpush1.msra.mxu0 0.0
        %1368 = vmatprep.subr.mxu0 0.0
        %1369 = vmatpush1.msra.mxu0 0.0
        %1370 = vmatprep.subr.mxu0 0.0
        %1371 = vmatpush1.msra.mxu0 0.0
        %1372 = vmatprep.subr.mxu0 0.0
        %1373 = vmatpush1.msra.mxu0 0.0
        %1374 = vmatprep.subr.mxu0 0.0
        %1375 = vmatpush1.msra.mxu0 0.0
        %1376 = vmatprep.subr.mxu0 0.0
        %1377 = vmatpush1.msra.mxu0 0.0
        %1378 = vmatprep.subr.mxu0 0.0
        %1379 = vmatpush1.msra.mxu0 0.0
        %1380 = vmatprep.subr.mxu0 0.0
        %1381 = vmatpush1.msra.mxu0 0.0
        %1382 = vmatprep.subr.mxu0 0.0
        %1383 = vmatpush1.msra.mxu0 0.0
        %1384 = vmatprep.subr.mxu0 0.0
        %1385 = vmatpush1.msra.mxu0 0.0
        %1386 = vmatprep.subr.mxu0 0.0
        %1387 = vmatpush1.msra.mxu0 0.0
        %1388 = vmatprep.subr.mxu0 0.0
        %1389 = vmatpush1.msra.mxu0 0.0
        %1390 = vmatprep.subr.mxu0 0.0
        %1391 = vmatpush1.msra.mxu0 0.0
        %1392 = vmatprep.subr.mxu0 0.0
        %1393 = vmatpush1.msra.mxu0 0.0
        %1394 = vmatprep.subr.mxu0 0.0
        %1395 = vmatpush1.msra.mxu0 0.0
        %1396 = vmatprep.subr.mxu0 0.0
        %1397 = vmatpush1.msra.mxu0 0.0
        %1398 = vmatprep.subr.mxu0 0.0
        %1399 = vmatpush1.msra.mxu0 0.0
        %1400 = vmatprep.subr.mxu0 0.0
        %1401 = vmatpush1.msra.mxu0 0.0
        %1402 = vmatprep.subr.mxu0 0.0
        %1403 = vmatpush1.msra.mxu0 0.0
        %1404 = vmatprep.subr.mxu0 0.0
        %1405 = vmatpush1.msra.mxu0 0.0
        %1406 = vmatprep.subr.mxu0 0.0
        %1407 = vmatpush1.msra.mxu0 0.0
        %1408 = vmatprep.subr.mxu0 0.0
        %1409 = vmatpush1.msra.mxu0 0.0
        %1410 = vmatprep.subr.mxu0 0.0
        %1411 = vmatpush1.msra.mxu0 0.0
        %1412 = vmatprep.subr.mxu0 0.0
        %1413 = vmatpush1.msra.mxu0 0.0
        %1414 = vmatprep.subr.mxu0 0.0
        %1415 = vmatpush1.msra.mxu0 0.0
        %1416 = vmatprep.subr.mxu0 0.0
        %1417 = vmatpush1.msra.mxu0 0.0
        %1418 = vmatprep.subr.mxu0 0.0
        %1419 = vmatpush1.msra.mxu0 0.0
        %1420 = vmatprep.subr.mxu0 0.0
        %1421 = vmatpush1.msra.mxu0 0.0
        %1422 = vmatprep.subr.mxu0 0.0
        %1423 = vmatpush1.msra.mxu0 0.0
        %1424 = vmatprep.subr.mxu0 0.0
        %1425 = vmatpush1.msra.mxu0 0.0
        %1426 = vmatprep.mubr.f32.mxu0 0.0
        %1427 = vmatmul.mubr.f32.gmra.mrb[0].mxu0 %v477
        %v1428 = vpop.f32.mrb[0].mxu0
        %v1429 = vadd.f32 %v1360, %v1428
        %v1430 = vpop.f32.mrb[0].mxu0
        %1431 = vmatprep.mubr.f32.mxu0 0.0
        %1432 = vmatmul.mubr.f32.gmra.mrb[0].mxu0 %v480
        %v1433 = vpop.f32.mrb[0].mxu0
        %v1434 = vadd.f32 %v1360, %v1433
        %v1435 = vpop.f32.mrb[0].mxu0
        %1436 = vdwg.mxu0
        %v1437 = vld [vmem:[%s8] sm:$0xff]
        %v1438 = vld [vmem:[%s8 + $0x8] sm:$0xff]
        %v1439 = vld [vmem:[%s8 + $0x10] sm:$0xff]
        %v1440 = vld [vmem:[%s8 + $0x18] sm:$0xff]
        %v1441 = vld [vmem:[%s9] sm:$0x1]
        %v1443 = vlaneseq
        %v1444 = vshrl.u32 %v1443, 7
        %v1445 = vsub.s32 0, %v1444
        %v1446 = vrot.slane %v1441, %v1445
        %v1449 = vsel %vm1278, %v1353, 0
        %1451 = vmatprep.subr.mxu0 0.0
        %1452 = vmatpush1.msra.mxu0 %v1437
        %1453 = vmatprep.subr.mxu0 0.0
        %1454 = vmatpush1.msra.mxu0 %v1438
        %1455 = vmatprep.subr.mxu0 0.0
        %1456 = vmatpush1.msra.mxu0 %v1439
        %1457 = vmatprep.subr.mxu0 0.0
        %1458 = vmatpush1.msra.mxu0 %v1440
        %1459 = vmatprep.subr.mxu0 0.0
        %1460 = vmatpush1.msra.mxu0 0.0
        %1461 = vmatprep.subr.mxu0 0.0
        %1462 = vmatpush1.msra.mxu0 0.0
        %1463 = vmatprep.subr.mxu0 0.0
        %1464 = vmatpush1.msra.mxu0 0.0
        %1465 = vmatprep.subr.mxu0 0.0
        %1466 = vmatpush1.msra.mxu0 0.0
        %1467 = vmatprep.subr.mxu0 0.0
        %1468 = vmatpush1.msra.mxu0 0.0
        %1469 = vmatprep.subr.mxu0 0.0
        %1470 = vmatpush1.msra.mxu0 0.0
        %1471 = vmatprep.subr.mxu0 0.0
        %1472 = vmatpush1.msra.mxu0 0.0
        %1473 = vmatprep.subr.mxu0 0.0
        %1474 = vmatpush1.msra.mxu0 0.0
        %1475 = vmatprep.subr.mxu0 0.0
        %1476 = vmatpush1.msra.mxu0 0.0
        %1477 = vmatprep.subr.mxu0 0.0
        %1478 = vmatpush1.msra.mxu0 0.0
        %1479 = vmatprep.subr.mxu0 0.0
        %1480 = vmatpush1.msra.mxu0 0.0
        %1481 = vmatprep.subr.mxu0 0.0
        %1482 = vmatpush1.msra.mxu0 0.0
        %1483 = vmatprep.subr.mxu0 0.0
        %1484 = vmatpush1.msra.mxu0 0.0
        %1485 = vmatprep.subr.mxu0 0.0
        %1486 = vmatpush1.msra.mxu0 0.0
        %1487 = vmatprep.subr.mxu0 0.0
        %1488 = vmatpush1.msra.mxu0 0.0
        %1489 = vmatprep.subr.mxu0 0.0
        %1490 = vmatpush1.msra.mxu0 0.0
        %1491 = vmatprep.subr.mxu0 0.0
        %1492 = vmatpush1.msra.mxu0 0.0
        %1493 = vmatprep.subr.mxu0 0.0
        %1494 = vmatpush1.msra.mxu0 0.0
        %1495 = vmatprep.subr.mxu0 0.0
        %1496 = vmatpush1.msra.mxu0 0.0
        %1497 = vmatprep.subr.mxu0 0.0
        %1498 = vmatpush1.msra.mxu0 0.0
        %1499 = vmatprep.subr.mxu0 0.0
        %1500 = vmatpush1.msra.mxu0 0.0
        %1501 = vmatprep.subr.mxu0 0.0
        %1502 = vmatpush1.msra.mxu0 0.0
        %1503 = vmatprep.subr.mxu0 0.0
        %1504 = vmatpush1.msra.mxu0 0.0
        %1505 = vmatprep.subr.mxu0 0.0
        %1506 = vmatpush1.msra.mxu0 0.0
        %1507 = vmatprep.subr.mxu0 0.0
        %1508 = vmatpush1.msra.mxu0 0.0
        %1509 = vmatprep.subr.mxu0 0.0
        %1510 = vmatpush1.msra.mxu0 0.0
        %1511 = vmatprep.subr.mxu0 0.0
        %1512 = vmatpush1.msra.mxu0 0.0
        %1513 = vmatprep.subr.mxu0 0.0
        %1514 = vmatpush1.msra.mxu0 0.0
        %1515 = vmatprep.mubr.f32.mxu0 0.0
        %1516 = vmatmul.mubr.f32.gmra.mrb[0].mxu0 %v1449
        %v1517 = vpop.f32.mrb[0].mxu0
        %v1518 = vadd.f32 %v1446, %v1517
        %v1519 = vpop.f32.mrb[0].mxu0
        %1520 = vdwg.mxu0
        %1523 = vrot.lane.b32.xlu0 %v1429, 120
        %v1524 = vpop.permute.xlu0 %1523
        %1525 = vrot.lane.b32.xlu0 %v1434, 120
        %v1526 = vpop.permute.xlu0 %1525
        %1529 = vrot.lane.b32.xlu0 %v1429, 112
        %v1530 = vpop.permute.xlu0 %1529
        %1531 = vrot.lane.b32.xlu0 %v1434, 112
        %v1532 = vpop.permute.xlu0 %1531
        %1535 = vrot.lane.b32.xlu0 %v1429, 104
        %v1536 = vpop.permute.xlu0 %1535
        %1537 = vrot.lane.b32.xlu0 %v1434, 104
        %v1538 = vpop.permute.xlu0 %1537
        %1542 = vrot.lane.b32.xlu0 %v1518, 120
        %v1543 = vpop.permute.xlu0 %1542
        %1544 = vrot.lane.b32.xlu0 %v1518, 112
        %v1545 = vpop.permute.xlu0 %1544
        %1546 = vrot.lane.b32.xlu0 %v1518, 104
        %v1547 = vpop.permute.xlu0 %1546
        %v1548 = vsel %vm475, %v1429, 0
        %v1550 = vsel %vm475, %v1434, 0
        %v1552 = vsel %vm475, %v1518, 0
        %1554 = vmatprep.subr.mxu0 0.0
        %1555 = vmatpush1.xpose.msra.mxu0 %v1552
        %1556 = vmatprep.subr.mxu0 0.0
        %1557 = vmatpush1.xpose.msra.mxu0 0.0
        %1558 = vmatprep.subr.mxu0 0.0
        %1559 = vmatpush1.xpose.msra.mxu0 0.0
        %1560 = vmatprep.subr.mxu0 0.0
        %1561 = vmatpush1.xpose.msra.mxu0 0.0
        %1562 = vmatprep.subr.mxu0 0.0
        %1563 = vmatpush1.xpose.msra.mxu0 0.0
        %1564 = vmatprep.subr.mxu0 0.0
        %1565 = vmatpush1.xpose.msra.mxu0 0.0
        %1566 = vmatprep.subr.mxu0 0.0
        %1567 = vmatpush1.xpose.msra.mxu0 0.0
        %1568 = vmatprep.subr.mxu0 0.0
        %1569 = vmatpush1.xpose.msra.mxu0 0.0
        %1570 = vmatprep.subr.mxu0 0.0
        %1571 = vmatpush1.xpose.msra.mxu0 0.0
        %1572 = vmatprep.subr.mxu0 0.0
        %1573 = vmatpush1.xpose.msra.mxu0 0.0
        %1574 = vmatprep.subr.mxu0 0.0
        %1575 = vmatpush1.xpose.msra.mxu0 0.0
        %1576 = vmatprep.subr.mxu0 0.0
        %1577 = vmatpush1.xpose.msra.mxu0 0.0
        %1578 = vmatprep.subr.mxu0 0.0
        %1579 = vmatpush1.xpose.msra.mxu0 0.0
        %1580 = vmatprep.subr.mxu0 0.0
        %1581 = vmatpush1.xpose.msra.mxu0 0.0
        %1582 = vmatprep.subr.mxu0 0.0
        %1583 = vmatpush1.xpose.msra.mxu0 0.0
        %1584 = vmatprep.subr.mxu0 0.0
        %1585 = vmatpush1.xpose.msra.mxu0 0.0
        %1586 = vmatprep.subr.mxu0 0.0
        %1587 = vmatpush1.xpose.msra.mxu0 0.0
        %1588 = vmatprep.subr.mxu0 0.0
        %1589 = vmatpush1.xpose.msra.mxu0 0.0
        %1590 = vmatprep.subr.mxu0 0.0
        %1591 = vmatpush1.xpose.msra.mxu0 0.0
        %1592 = vmatprep.subr.mxu0 0.0
        %1593 = vmatpush1.xpose.msra.mxu0 0.0
        %1594 = vmatprep.subr.mxu0 0.0
        %1595 = vmatpush1.xpose.msra.mxu0 0.0
        %1596 = vmatprep.subr.mxu0 0.0
        %1597 = vmatpush1.xpose.msra.mxu0 0.0
        %1598 = vmatprep.subr.mxu0 0.0
        %1599 = vmatpush1.xpose.msra.mxu0 0.0
        %1600 = vmatprep.subr.mxu0 0.0
        %1601 = vmatpush1.xpose.msra.mxu0 0.0
        %1602 = vmatprep.subr.mxu0 0.0
        %1603 = vmatpush1.xpose.msra.mxu0 0.0
        %1604 = vmatprep.subr.mxu0 0.0
        %1605 = vmatpush1.xpose.msra.mxu0 0.0
        %1606 = vmatprep.subr.mxu0 0.0
        %1607 = vmatpush1.xpose.msra.mxu0 0.0
        %1608 = vmatprep.subr.mxu0 0.0
        %1609 = vmatpush1.xpose.msra.mxu0 0.0
        %1610 = vmatprep.subr.mxu0 0.0
        %1611 = vmatpush1.xpose.msra.mxu0 0.0
        %1612 = vmatprep.subr.mxu0 0.0
        %1613 = vmatpush1.xpose.msra.mxu0 0.0
        %1614 = vmatprep.subr.mxu0 0.0
        %1615 = vmatpush1.xpose.msra.mxu0 0.0
        %1616 = vmatprep.subr.mxu0 0.0
        %1617 = vmatpush1.xpose.msra.mxu0 0.0
        %1618 = vmatprep.mubr.f32.mxu0 0.0
        %1619 = vmatmul.mubr.f32.gmra.mrb[0].mxu0 %v1548
        %v1620 = vpop.f32.mrb[0].mxu0
        %v1621 = vadd.f32 0.0, %v1620
        %v1622 = vpop.f32.mrb[0].mxu0
        %1623 = vmatprep.mubr.f32.mxu0 0.0
        %1624 = vmatmul.mubr.f32.gmra.mrb[0].mxu0 %v1550
        %v1625 = vpop.f32.mrb[0].mxu0
        %v1626 = vadd.f32 0.0, %v1625
        %v1627 = vpop.f32.mrb[0].mxu0
        %1628 = vdwg.mxu0
        %v1629 = vsel %vm475, %v1524, 0
        %v1631 = vsel %vm475, %v1526, 0
        %v1633 = vsel %vm475, %v1543, 0
        %1635 = vmatprep.subr.mxu0 0.0
        %1636 = vmatpush1.xpose.msra.mxu0 %v1633
        %1637 = vmatprep.subr.mxu0 0.0
        %1638 = vmatpush1.xpose.msra.mxu0 0.0
        %1639 = vmatprep.subr.mxu0 0.0
        %1640 = vmatpush1.xpose.msra.mxu0 0.0
        %1641 = vmatprep.subr.mxu0 0.0
        %1642 = vmatpush1.xpose.msra.mxu0 0.0
        %1643 = vmatprep.subr.mxu0 0.0
        %1644 = vmatpush1.xpose.msra.mxu0 0.0
        %1645 = vmatprep.subr.mxu0 0.0
        %1646 = vmatpush1.xpose.msra.mxu0 0.0
        %1647 = vmatprep.subr.mxu0 0.0
        %1648 = vmatpush1.xpose.msra.mxu0 0.0
        %1649 = vmatprep.subr.mxu0 0.0
        %1650 = vmatpush1.xpose.msra.mxu0 0.0
        %1651 = vmatprep.subr.mxu0 0.0
        %1652 = vmatpush1.xpose.msra.mxu0 0.0
        %1653 = vmatprep.subr.mxu0 0.0
        %1654 = vmatpush1.xpose.msra.mxu0 0.0
        %1655 = vmatprep.subr.mxu0 0.0
        %1656 = vmatpush1.xpose.msra.mxu0 0.0
        %1657 = vmatprep.subr.mxu0 0.0
        %1658 = vmatpush1.xpose.msra.mxu0 0.0
        %1659 = vmatprep.subr.mxu0 0.0
        %1660 = vmatpush1.xpose.msra.mxu0 0.0
        %1661 = vmatprep.subr.mxu0 0.0
        %1662 = vmatpush1.xpose.msra.mxu0 0.0
        %1663 = vmatprep.subr.mxu0 0.0
        %1664 = vmatpush1.xpose.msra.mxu0 0.0
        %1665 = vmatprep.subr.mxu0 0.0
        %1666 = vmatpush1.xpose.msra.mxu0 0.0
        %1667 = vmatprep.subr.mxu0 0.0
        %1668 = vmatpush1.xpose.msra.mxu0 0.0
        %1669 = vmatprep.subr.mxu0 0.0
        %1670 = vmatpush1.xpose.msra.mxu0 0.0
        %1671 = vmatprep.subr.mxu0 0.0
        %1672 = vmatpush1.xpose.msra.mxu0 0.0
        %1673 = vmatprep.subr.mxu0 0.0
        %1674 = vmatpush1.xpose.msra.mxu0 0.0
        %1675 = vmatprep.subr.mxu0 0.0
        %1676 = vmatpush1.xpose.msra.mxu0 0.0
        %1677 = vmatprep.subr.mxu0 0.0
        %1678 = vmatpush1.xpose.msra.mxu0 0.0
        %1679 = vmatprep.subr.mxu0 0.0
        %1680 = vmatpush1.xpose.msra.mxu0 0.0
        %1681 = vmatprep.subr.mxu0 0.0
        %1682 = vmatpush1.xpose.msra.mxu0 0.0
        %1683 = vmatprep.subr.mxu0 0.0
        %1684 = vmatpush1.xpose.msra.mxu0 0.0
        %1685 = vmatprep.subr.mxu0 0.0
        %1686 = vmatpush1.xpose.msra.mxu0 0.0
        %1687 = vmatprep.subr.mxu0 0.0
        %1688 = vmatpush1.xpose.msra.mxu0 0.0
        %1689 = vmatprep.subr.mxu0 0.0
        %1690 = vmatpush1.xpose.msra.mxu0 0.0
        %1691 = vmatprep.subr.mxu0 0.0
        %1692 = vmatpush1.xpose.msra.mxu0 0.0
        %1693 = vmatprep.subr.mxu0 0.0
        %1694 = vmatpush1.xpose.msra.mxu0 0.0
        %1695 = vmatprep.subr.mxu0 0.0
        %1696 = vmatpush1.xpose.msra.mxu0 0.0
        %1697 = vmatprep.subr.mxu0 0.0
        %1698 = vmatpush1.xpose.msra.mxu0 0.0
        %1699 = vmatprep.mubr.f32.mxu0 0.0
        %1700 = vmatmul.mubr.f32.gmra.mrb[0].mxu0 %v1629
        %v1701 = vpop.f32.mrb[0].mxu0
        %v1702 = vadd.f32 0.0, %v1701
        %v1703 = vpop.f32.mrb[0].mxu0
        %1704 = vmatprep.mubr.f32.mxu0 0.0
        %1705 = vmatmul.mubr.f32.gmra.mrb[0].mxu0 %v1631
        %v1706 = vpop.f32.mrb[0].mxu0
        %v1707 = vadd.f32 0.0, %v1706
        %v1708 = vpop.f32.mrb[0].mxu0
        %1709 = vdwg.mxu0
        %v1710 = vsel %vm475, %v1530, 0
        %v1712 = vsel %vm475, %v1532, 0
        %v1714 = vsel %vm475, %v1545, 0
        %1716 = vmatprep.subr.mxu0 0.0
        %1717 = vmatpush1.xpose.msra.mxu0 %v1714
        %1718 = vmatprep.subr.mxu0 0.0
        %1719 = vmatpush1.xpose.msra.mxu0 0.0
        %1720 = vmatprep.subr.mxu0 0.0
        %1721 = vmatpush1.xpose.msra.mxu0 0.0
        %1722 = vmatprep.subr.mxu0 0.0
        %1723 = vmatpush1.xpose.msra.mxu0 0.0
        %1724 = vmatprep.subr.mxu0 0.0
        %1725 = vmatpush1.xpose.msra.mxu0 0.0
        %1726 = vmatprep.subr.mxu0 0.0
        %1727 = vmatpush1.xpose.msra.mxu0 0.0
        %1728 = vmatprep.subr.mxu0 0.0
        %1729 = vmatpush1.xpose.msra.mxu0 0.0
        %1730 = vmatprep.subr.mxu0 0.0
        %1731 = vmatpush1.xpose.msra.mxu0 0.0
        %1732 = vmatprep.subr.mxu0 0.0
        %1733 = vmatpush1.xpose.msra.mxu0 0.0
        %1734 = vmatprep.subr.mxu0 0.0
        %1735 = vmatpush1.xpose.msra.mxu0 0.0
        %1736 = vmatprep.subr.mxu0 0.0
        %1737 = vmatpush1.xpose.msra.mxu0 0.0
        %1738 = vmatprep.subr.mxu0 0.0
        %1739 = vmatpush1.xpose.msra.mxu0 0.0
        %1740 = vmatprep.subr.mxu0 0.0
        %1741 = vmatpush1.xpose.msra.mxu0 0.0
        %1742 = vmatprep.subr.mxu0 0.0
        %1743 = vmatpush1.xpose.msra.mxu0 0.0
        %1744 = vmatprep.subr.mxu0 0.0
        %1745 = vmatpush1.xpose.msra.mxu0 0.0
        %1746 = vmatprep.subr.mxu0 0.0
        %1747 = vmatpush1.xpose.msra.mxu0 0.0
        %1748 = vmatprep.subr.mxu0 0.0
        %1749 = vmatpush1.xpose.msra.mxu0 0.0
        %1750 = vmatprep.subr.mxu0 0.0
        %1751 = vmatpush1.xpose.msra.mxu0 0.0
        %1752 = vmatprep.subr.mxu0 0.0
        %1753 = vmatpush1.xpose.msra.mxu0 0.0
        %1754 = vmatprep.subr.mxu0 0.0
        %1755 = vmatpush1.xpose.msra.mxu0 0.0
        %1756 = vmatprep.subr.mxu0 0.0
        %1757 = vmatpush1.xpose.msra.mxu0 0.0
        %1758 = vmatprep.subr.mxu0 0.0
        %1759 = vmatpush1.xpose.msra.mxu0 0.0
        %1760 = vmatprep.subr.mxu0 0.0
        %1761 = vmatpush1.xpose.msra.mxu0 0.0
        %1762 = vmatprep.subr.mxu0 0.0
        %1763 = vmatpush1.xpose.msra.mxu0 0.0
        %1764 = vmatprep.subr.mxu0 0.0
        %1765 = vmatpush1.xpose.msra.mxu0 0.0
        %1766 = vmatprep.subr.mxu0 0.0
        %1767 = vmatpush1.xpose.msra.mxu0 0.0
        %1768 = vmatprep.subr.mxu0 0.0
        %1769 = vmatpush1.xpose.msra.mxu0 0.0
        %1770 = vmatprep.subr.mxu0 0.0
        %1771 = vmatpush1.xpose.msra.mxu0 0.0
        %1772 = vmatprep.subr.mxu0 0.0
        %1773 = vmatpush1.xpose.msra.mxu0 0.0
        %1774 = vmatprep.subr.mxu0 0.0
        %1775 = vmatpush1.xpose.msra.mxu0 0.0
        %1776 = vmatprep.subr.mxu0 0.0
        %1777 = vmatpush1.xpose.msra.mxu0 0.0
        %1778 = vmatprep.subr.mxu0 0.0
        %1779 = vmatpush1.xpose.msra.mxu0 0.0
        %1780 = vmatprep.mubr.f32.mxu0 0.0
        %1781 = vmatmul.mubr.f32.gmra.mrb[0].mxu0 %v1710
        %v1782 = vpop.f32.mrb[0].mxu0
        %v1783 = vadd.f32 0.0, %v1782
        %v1784 = vpop.f32.mrb[0].mxu0
        %1785 = vmatprep.mubr.f32.mxu0 0.0
        %1786 = vmatmul.mubr.f32.gmra.mrb[0].mxu0 %v1712
        %v1787 = vpop.f32.mrb[0].mxu0
        %v1788 = vadd.f32 0.0, %v1787
        %v1789 = vpop.f32.mrb[0].mxu0
        %1790 = vdwg.mxu0
        %v1791 = vsel %vm475, %v1536, 0
        %v1793 = vsel %vm475, %v1538, 0
        %v1795 = vsel %vm475, %v1547, 0
        %1797 = vmatprep.subr.mxu0 0.0
        %1798 = vmatpush1.xpose.msra.mxu0 %v1795
        %1799 = vmatprep.subr.mxu0 0.0
        %1800 = vmatpush1.xpose.msra.mxu0 0.0
        %1801 = vmatprep.subr.mxu0 0.0
        %1802 = vmatpush1.xpose.msra.mxu0 0.0
        %1803 = vmatprep.subr.mxu0 0.0
        %1804 = vmatpush1.xpose.msra.mxu0 0.0
        %1805 = vmatprep.subr.mxu0 0.0
        %1806 = vmatpush1.xpose.msra.mxu0 0.0
        %1807 = vmatprep.subr.mxu0 0.0
        %1808 = vmatpush1.xpose.msra.mxu0 0.0
        %1809 = vmatprep.subr.mxu0 0.0
        %1810 = vmatpush1.xpose.msra.mxu0 0.0
        %1811 = vmatprep.subr.mxu0 0.0
        %1812 = vmatpush1.xpose.msra.mxu0 0.0
        %1813 = vmatprep.subr.mxu0 0.0
        %1814 = vmatpush1.xpose.msra.mxu0 0.0
        %1815 = vmatprep.subr.mxu0 0.0
        %1816 = vmatpush1.xpose.msra.mxu0 0.0
        %1817 = vmatprep.subr.mxu0 0.0
        %1818 = vmatpush1.xpose.msra.mxu0 0.0
        %1819 = vmatprep.subr.mxu0 0.0
        %1820 = vmatpush1.xpose.msra.mxu0 0.0
        %1821 = vmatprep.subr.mxu0 0.0
        %1822 = vmatpush1.xpose.msra.mxu0 0.0
        %1823 = vmatprep.subr.mxu0 0.0
        %1824 = vmatpush1.xpose.msra.mxu0 0.0
        %1825 = vmatprep.subr.mxu0 0.0
        %1826 = vmatpush1.xpose.msra.mxu0 0.0
        %1827 = vmatprep.subr.mxu0 0.0
        %1828 = vmatpush1.xpose.msra.mxu0 0.0
        %1829 = vmatprep.subr.mxu0 0.0
        %1830 = vmatpush1.xpose.msra.mxu0 0.0
        %1831 = vmatprep.subr.mxu0 0.0
        %1832 = vmatpush1.xpose.msra.mxu0 0.0
        %1833 = vmatprep.subr.mxu0 0.0
        %1834 = vmatpush1.xpose.msra.mxu0 0.0
        %1835 = vmatprep.subr.mxu0 0.0
        %1836 = vmatpush1.xpose.msra.mxu0 0.0
        %1837 = vmatprep.subr.mxu0 0.0
        %1838 = vmatpush1.xpose.msra.mxu0 0.0
        %1839 = vmatprep.subr.mxu0 0.0
        %1840 = vmatpush1.xpose.msra.mxu0 0.0
        %1841 = vmatprep.subr.mxu0 0.0
        %1842 = vmatpush1.xpose.msra.mxu0 0.0
        %1843 = vmatprep.subr.mxu0 0.0
        %1844 = vmatpush1.xpose.msra.mxu0 0.0
        %1845 = vmatprep.subr.mxu0 0.0
        %1846 = vmatpush1.xpose.msra.mxu0 0.0
        %1847 = vmatprep.subr.mxu0 0.0
        %1848 = vmatpush1.xpose.msra.mxu0 0.0
        %1849 = vmatprep.subr.mxu0 0.0
        %1850 = vmatpush1.xpose.msra.mxu0 0.0
        %1851 = vmatprep.subr.mxu0 0.0
        %1852 = vmatpush1.xpose.msra.mxu0 0.0
        %1853 = vmatprep.subr.mxu0 0.0
        %1854 = vmatpush1.xpose.msra.mxu0 0.0
        %1855 = vmatprep.subr.mxu0 0.0
        %1856 = vmatpush1.xpose.msra.mxu0 0.0
        %1857 = vmatprep.subr.mxu0 0.0
        %1858 = vmatpush1.xpose.msra.mxu0 0.0
        %1859 = vmatprep.subr.mxu0 0.0
        %1860 = vmatpush1.xpose.msra.mxu0 0.0
        %1861 = vmatprep.mubr.f32.mxu0 0.0
        %1862 = vmatmul.mubr.f32.gmra.mrb[0].mxu0 %v1791
        %v1863 = vpop.f32.mrb[0].mxu0
        %v1864 = vadd.f32 0.0, %v1863
        %v1865 = vpop.f32.mrb[0].mxu0
        %1866 = vmatprep.mubr.f32.mxu0 0.0
        %1867 = vmatmul.mubr.f32.gmra.mrb[0].mxu0 %v1793
        %v1868 = vpop.f32.mrb[0].mxu0
        %v1869 = vadd.f32 0.0, %v1868
        %v1870 = vpop.f32.mrb[0].mxu0
        %1871 = vdwg.mxu0
        %v1872 = vsel %vm475, %v1621, -inf
        %1873 = vmax.xlane.f32.xlu0 %v1872
        %v1874 = vpop.xlane.xlu0 %1873
        %v1875 = vsel %vm475, %v1626, -inf
        %1876 = vmax.xlane.f32.xlu0 %v1875
        %v1877 = vpop.xlane.xlu0 %1876
        %v1878 = vsel %vm475, %v1702, -inf
        %1879 = vmax.xlane.f32.xlu0 %v1878
        %v1880 = vpop.xlane.xlu0 %1879
        %v1881 = vsel %vm475, %v1707, -inf
        %1882 = vmax.xlane.f32.xlu0 %v1881
        %v1883 = vpop.xlane.xlu0 %1882
        %v1884 = vsel %vm475, %v1783, -inf
        %1885 = vmax.xlane.f32.xlu0 %v1884
        %v1886 = vpop.xlane.xlu0 %1885
        %v1887 = vsel %vm475, %v1788, -inf
        %1888 = vmax.xlane.f32.xlu0 %v1887
        %v1889 = vpop.xlane.xlu0 %1888
        %v1890 = vsel %vm475, %v1864, -inf
        %1891 = vmax.xlane.f32.xlu0 %v1890
        %v1892 = vpop.xlane.xlu0 %1891
        %v1893 = vsel %vm475, %v1869, -inf
        %1894 = vmax.xlane.f32.xlu0 %v1893
        %v1895 = vpop.xlane.xlu0 %1894
        %v1896 = vsub.f32 %v1621, %v1874
        %v1897 = vsub.f32 %v1626, %v1877
        %v1898 = vsub.f32 %v1702, %v1880
        %v1899 = vsub.f32 %v1707, %v1883
        %v1900 = vsub.f32 %v1783, %v1886
        %v1901 = vsub.f32 %v1788, %v1889
        %v1902 = vsub.f32 %v1864, %v1892
        %v1903 = vsub.f32 %v1869, %v1895
        %v1904 = vmul.f32 %v1896, 1.442695
        %v1905 = vpow.pop %v1904
        %v1906 = vmul.f32 %v1897, 1.442695
        %v1907 = vpow.pop %v1906
        %v1908 = vmul.f32 %v1898, 1.442695
        %v1909 = vpow.pop %v1908
        %v1910 = vmul.f32 %v1899, 1.442695
        %v1911 = vpow.pop %v1910
        %v1912 = vmul.f32 %v1900, 1.442695
        %v1913 = vpow.pop %v1912
        %v1914 = vmul.f32 %v1901, 1.442695
        %v1915 = vpow.pop %v1914
        %v1916 = vmul.f32 %v1902, 1.442695
        %v1917 = vpow.pop %v1916
        %v1918 = vmul.f32 %v1903, 1.442695
        %v1919 = vpow.pop %v1918
        %v1920 = vsel %vm475, %v1905, 0.0
        %1921 = vadd.xlane.f32.xlu0 %v1920
        %v1922 = vpop.xlane.xlu0 %1921
        %v1923 = vsel %vm475, %v1907, 0.0
        %1924 = vadd.xlane.f32.xlu0 %v1923
        %v1925 = vpop.xlane.xlu0 %1924
        %v1926 = vsel %vm475, %v1909, 0.0
        %1927 = vadd.xlane.f32.xlu0 %v1926
        %v1928 = vpop.xlane.xlu0 %1927
        %v1929 = vsel %vm475, %v1911, 0.0
        %1930 = vadd.xlane.f32.xlu0 %v1929
        %v1931 = vpop.xlane.xlu0 %1930
        %v1932 = vsel %vm475, %v1913, 0.0
        %1933 = vadd.xlane.f32.xlu0 %v1932
        %v1934 = vpop.xlane.xlu0 %1933
        %v1935 = vsel %vm475, %v1915, 0.0
        %1936 = vadd.xlane.f32.xlu0 %v1935
        %v1937 = vpop.xlane.xlu0 %1936
        %v1938 = vsel %vm475, %v1917, 0.0
        %1939 = vadd.xlane.f32.xlu0 %v1938
        %v1940 = vpop.xlane.xlu0 %1939
        %v1941 = vsel %vm475, %v1919, 0.0
        %1942 = vadd.xlane.f32.xlu0 %v1941
        %v1943 = vpop.xlane.xlu0 %1942
        %v1944 = vrcp.pop %v1922
        %v1945 = vrcp.pop %v1925
        %v1946 = vrcp.pop %v1928
        %v1947 = vrcp.pop %v1931
        %v1948 = vrcp.pop %v1934
        %v1949 = vrcp.pop %v1937
        %v1950 = vrcp.pop %v1940
        %v1951 = vrcp.pop %v1943
        %v1952 = vmul.f32 %v1905, %v1944
        %v1953 = vmul.f32 %v1907, %v1945
        %v1954 = vmul.f32 %v1909, %v1946
        %v1955 = vmul.f32 %v1911, %v1947
        %v1956 = vmul.f32 %v1913, %v1948
        %v1957 = vmul.f32 %v1915, %v1949
        %v1958 = vmul.f32 %v1917, %v1950
        %v1959 = vmul.f32 %v1919, %v1951
        %1960 = vrot.lane.b32.xlu0 %v1518, 96
        %v1961 = vpop.permute.xlu0 %1960
        %v1964 = vsel %vm475, %v1952, 0
        %v1967 = vsel %vm475, %v1953, 0
        %1969 = vmatprep.subr.mxu0 0.0
        %1970 = vmatpush1.msra.mxu0 %v1961
        %1971 = vmatprep.subr.mxu0 0.0
        %1972 = vmatpush1.msra.mxu0 0.0
        %1973 = vmatprep.subr.mxu0 0.0
        %1974 = vmatpush1.msra.mxu0 0.0
        %1975 = vmatprep.subr.mxu0 0.0
        %1976 = vmatpush1.msra.mxu0 0.0
        %1977 = vmatprep.subr.mxu0 0.0
        %1978 = vmatpush1.msra.mxu0 0.0
        %1979 = vmatprep.subr.mxu0 0.0
        %1980 = vmatpush1.msra.mxu0 0.0
        %1981 = vmatprep.subr.mxu0 0.0
        %1982 = vmatpush1.msra.mxu0 0.0
        %1983 = vmatprep.subr.mxu0 0.0
        %1984 = vmatpush1.msra.mxu0 0.0
        %1985 = vmatprep.subr.mxu0 0.0
        %1986 = vmatpush1.msra.mxu0 0.0
        %1987 = vmatprep.subr.mxu0 0.0
        %1988 = vmatpush1.msra.mxu0 0.0
        %1989 = vmatprep.subr.mxu0 0.0
        %1990 = vmatpush1.msra.mxu0 0.0
        %1991 = vmatprep.subr.mxu0 0.0
        %1992 = vmatpush1.msra.mxu0 0.0
        %1993 = vmatprep.subr.mxu0 0.0
        %1994 = vmatpush1.msra.mxu0 0.0
        %1995 = vmatprep.subr.mxu0 0.0
        %1996 = vmatpush1.msra.mxu0 0.0
        %1997 = vmatprep.subr.mxu0 0.0
        %1998 = vmatpush1.msra.mxu0 0.0
        %1999 = vmatprep.subr.mxu0 0.0
        %2000 = vmatpush1.msra.mxu0 0.0
        %2001 = vmatprep.subr.mxu0 0.0
        %2002 = vmatpush1.msra.mxu0 0.0
        %2003 = vmatprep.subr.mxu0 0.0
        %2004 = vmatpush1.msra.mxu0 0.0
        %2005 = vmatprep.subr.mxu0 0.0
        %2006 = vmatpush1.msra.mxu0 0.0
        %2007 = vmatprep.subr.mxu0 0.0
        %2008 = vmatpush1.msra.mxu0 0.0
        %2009 = vmatprep.subr.mxu0 0.0
        %2010 = vmatpush1.msra.mxu0 0.0
        %2011 = vmatprep.subr.mxu0 0.0
        %2012 = vmatpush1.msra.mxu0 0.0
        %2013 = vmatprep.subr.mxu0 0.0
        %2014 = vmatpush1.msra.mxu0 0.0
        %2015 = vmatprep.subr.mxu0 0.0
        %2016 = vmatpush1.msra.mxu0 0.0
        %2017 = vmatprep.subr.mxu0 0.0
        %2018 = vmatpush1.msra.mxu0 0.0
        %2019 = vmatprep.subr.mxu0 0.0
        %2020 = vmatpush1.msra.mxu0 0.0
        %2021 = vmatprep.subr.mxu0 0.0
        %2022 = vmatpush1.msra.mxu0 0.0
        %2023 = vmatprep.subr.mxu0 0.0
        %2024 = vmatpush1.msra.mxu0 0.0
        %2025 = vmatprep.subr.mxu0 0.0
        %2026 = vmatpush1.msra.mxu0 0.0
        %2027 = vmatprep.subr.mxu0 0.0
        %2028 = vmatpush1.msra.mxu0 0.0
        %2029 = vmatprep.subr.mxu0 0.0
        %2030 = vmatpush1.msra.mxu0 0.0
        %2031 = vmatprep.subr.mxu0 0.0
        %2032 = vmatpush1.msra.mxu0 0.0
        %2033 = vmatprep.mubr.f32.mxu0 0.0
        %2034 = vmatmul.mubr.f32.gmra.mrb[0].mxu0 %v1964
        %v2035 = vpop.f32.mrb[0].mxu0
        %v2036 = vadd.f32 0.0, %v2035
        %v2037 = vpop.f32.mrb[0].mxu0
        %2038 = vmatprep.mubr.f32.mxu0 0.0
        %2039 = vmatmul.mubr.f32.gmra.mrb[0].mxu0 %v1967
        %v2040 = vpop.f32.mrb[0].mxu0
        %v2041 = vadd.f32 0.0, %v2040
        %v2042 = vpop.f32.mrb[0].mxu0
        %2043 = vdwg.mxu0
        %2044 = vrot.lane.b32.xlu0 %v1543, 96
        %v2045 = vpop.permute.xlu0 %2044
        %v2048 = vsel %vm475, %v1954, 0
        %v2051 = vsel %vm475, %v1955, 0
        %2053 = vmatprep.subr.mxu0 0.0
        %2054 = vmatpush1.msra.mxu0 %v2045
        %2055 = vmatprep.subr.mxu0 0.0
        %2056 = vmatpush1.msra.mxu0 0.0
        %2057 = vmatprep.subr.mxu0 0.0
        %2058 = vmatpush1.msra.mxu0 0.0
        %2059 = vmatprep.subr.mxu0 0.0
        %2060 = vmatpush1.msra.mxu0 0.0
        %2061 = vmatprep.subr.mxu0 0.0
        %2062 = vmatpush1.msra.mxu0 0.0
        %2063 = vmatprep.subr.mxu0 0.0
        %2064 = vmatpush1.msra.mxu0 0.0
        %2065 = vmatprep.subr.mxu0 0.0
        %2066 = vmatpush1.msra.mxu0 0.0
        %2067 = vmatprep.subr.mxu0 0.0
        %2068 = vmatpush1.msra.mxu0 0.0
        %2069 = vmatprep.subr.mxu0 0.0
        %2070 = vmatpush1.msra.mxu0 0.0
        %2071 = vmatprep.subr.mxu0 0.0
        %2072 = vmatpush1.msra.mxu0 0.0
        %2073 = vmatprep.subr.mxu0 0.0
        %2074 = vmatpush1.msra.mxu0 0.0
        %2075 = vmatprep.subr.mxu0 0.0
        %2076 = vmatpush1.msra.mxu0 0.0
        %2077 = vmatprep.subr.mxu0 0.0
        %2078 = vmatpush1.msra.mxu0 0.0
        %2079 = vmatprep.subr.mxu0 0.0
        %2080 = vmatpush1.msra.mxu0 0.0
        %2081 = vmatprep.subr.mxu0 0.0
        %2082 = vmatpush1.msra.mxu0 0.0
        %2083 = vmatprep.subr.mxu0 0.0
        %2084 = vmatpush1.msra.mxu0 0.0
        %2085 = vmatprep.subr.mxu0 0.0
        %2086 = vmatpush1.msra.mxu0 0.0
        %2087 = vmatprep.subr.mxu0 0.0
        %2088 = vmatpush1.msra.mxu0 0.0
        %2089 = vmatprep.subr.mxu0 0.0
        %2090 = vmatpush1.msra.mxu0 0.0
        %2091 = vmatprep.subr.mxu0 0.0
        %2092 = vmatpush1.msra.mxu0 0.0
        %2093 = vmatprep.subr.mxu0 0.0
        %2094 = vmatpush1.msra.mxu0 0.0
        %2095 = vmatprep.subr.mxu0 0.0
        %2096 = vmatpush1.msra.mxu0 0.0
        %2097 = vmatprep.subr.mxu0 0.0
        %2098 = vmatpush1.msra.mxu0 0.0
        %2099 = vmatprep.subr.mxu0 0.0
        %2100 = vmatpush1.msra.mxu0 0.0
        %2101 = vmatprep.subr.mxu0 0.0
        %2102 = vmatpush1.msra.mxu0 0.0
        %2103 = vmatprep.subr.mxu0 0.0
        %2104 = vmatpush1.msra.mxu0 0.0
        %2105 = vmatprep.subr.mxu0 0.0
        %2106 = vmatpush1.msra.mxu0 0.0
        %2107 = vmatprep.subr.mxu0 0.0
        %2108 = vmatpush1.msra.mxu0 0.0
        %2109 = vmatprep.subr.mxu0 0.0
        %2110 = vmatpush1.msra.mxu0 0.0
        %2111 = vmatprep.subr.mxu0 0.0
        %2112 = vmatpush1.msra.mxu0 0.0
        %2113 = vmatprep.subr.mxu0 0.0
        %2114 = vmatpush1.msra.mxu0 0.0
        %2115 = vmatprep.subr.mxu0 0.0
        %2116 = vmatpush1.msra.mxu0 0.0
        %2117 = vmatprep.mubr.f32.mxu0 0.0
        %2118 = vmatmul.mubr.f32.gmra.mrb[0].mxu0 %v2048
        %v2119 = vpop.f32.mrb[0].mxu0
        %v2120 = vadd.f32 0.0, %v2119
        %v2121 = vpop.f32.mrb[0].mxu0
        %2122 = vmatprep.mubr.f32.mxu0 0.0
        %2123 = vmatmul.mubr.f32.gmra.mrb[0].mxu0 %v2051
        %v2124 = vpop.f32.mrb[0].mxu0
        %v2125 = vadd.f32 0.0, %v2124
        %v2126 = vpop.f32.mrb[0].mxu0
        %2127 = vdwg.mxu0
        %2128 = vrot.lane.b32.xlu0 %v1545, 96
        %v2129 = vpop.permute.xlu0 %2128
        %v2132 = vsel %vm475, %v1956, 0
        %v2135 = vsel %vm475, %v1957, 0
        %2137 = vmatprep.subr.mxu0 0.0
        %2138 = vmatpush1.msra.mxu0 %v2129
        %2139 = vmatprep.subr.mxu0 0.0
        %2140 = vmatpush1.msra.mxu0 0.0
        %2141 = vmatprep.subr.mxu0 0.0
        %2142 = vmatpush1.msra.mxu0 0.0
        %2143 = vmatprep.subr.mxu0 0.0
        %2144 = vmatpush1.msra.mxu0 0.0
        %2145 = vmatprep.subr.mxu0 0.0
        %2146 = vmatpush1.msra.mxu0 0.0
        %2147 = vmatprep.subr.mxu0 0.0
        %2148 = vmatpush1.msra.mxu0 0.0
        %2149 = vmatprep.subr.mxu0 0.0
        %2150 = vmatpush1.msra.mxu0 0.0
        %2151 = vmatprep.subr.mxu0 0.0
        %2152 = vmatpush1.msra.mxu0 0.0
        %2153 = vmatprep.subr.mxu0 0.0
        %2154 = vmatpush1.msra.mxu0 0.0
        %2155 = vmatprep.subr.mxu0 0.0
        %2156 = vmatpush1.msra.mxu0 0.0
        %2157 = vmatprep.subr.mxu0 0.0
        %2158 = vmatpush1.msra.mxu0 0.0
        %2159 = vmatprep.subr.mxu0 0.0
        %2160 = vmatpush1.msra.mxu0 0.0
        %2161 = vmatprep.subr.mxu0 0.0
        %2162 = vmatpush1.msra.mxu0 0.0
        %2163 = vmatprep.subr.mxu0 0.0
        %2164 = vmatpush1.msra.mxu0 0.0
        %2165 = vmatprep.subr.mxu0 0.0
        %2166 = vmatpush1.msra.mxu0 0.0
        %2167 = vmatprep.subr.mxu0 0.0
        %2168 = vmatpush1.msra.mxu0 0.0
        %2169 = vmatprep.subr.mxu0 0.0
        %2170 = vmatpush1.msra.mxu0 0.0
        %2171 = vmatprep.subr.mxu0 0.0
        %2172 = vmatpush1.msra.mxu0 0.0
        %2173 = vmatprep.subr.mxu0 0.0
        %2174 = vmatpush1.msra.mxu0 0.0
        %2175 = vmatprep.subr.mxu0 0.0
        %2176 = vmatpush1.msra.mxu0 0.0
        %2177 = vmatprep.subr.mxu0 0.0
        %2178 = vmatpush1.msra.mxu0 0.0
        %2179 = vmatprep.subr.mxu0 0.0
        %2180 = vmatpush1.msra.mxu0 0.0
        %2181 = vmatprep.subr.mxu0 0.0
        %2182 = vmatpush1.msra.mxu0 0.0
        %2183 = vmatprep.subr.mxu0 0.0
        %2184 = vmatpush1.msra.mxu0 0.0
        %2185 = vmatprep.subr.mxu0 0.0
        %2186 = vmatpush1.msra.mxu0 0.0
        %2187 = vmatprep.subr.mxu0 0.0
        %2188 = vmatpush1.msra.mxu0 0.0
        %2189 = vmatprep.subr.mxu0 0.0
        %2190 = vmatpush1.msra.mxu0 0.0
        %2191 = vmatprep.subr.mxu0 0.0
        %2192 = vmatpush1.msra.mxu0 0.0
        %2193 = vmatprep.subr.mxu0 0.0
        %2194 = vmatpush1.msra.mxu0 0.0
        %2195 = vmatprep.subr.mxu0 0.0
        %2196 = vmatpush1.msra.mxu0 0.0
        %2197 = vmatprep.subr.mxu0 0.0
        %2198 = vmatpush1.msra.mxu0 0.0
        %2199 = vmatprep.subr.mxu0 0.0
        %2200 = vmatpush1.msra.mxu0 0.0
        %2201 = vmatprep.mubr.f32.mxu0 0.0
        %2202 = vmatmul.mubr.f32.gmra.mrb[0].mxu0 %v2132
        %v2203 = vpop.f32.mrb[0].mxu0
        %v2204 = vadd.f32 0.0, %v2203
        %v2205 = vpop.f32.mrb[0].mxu0
        %2206 = vmatprep.mubr.f32.mxu0 0.0
        %2207 = vmatmul.mubr.f32.gmra.mrb[0].mxu0 %v2135
        %v2208 = vpop.f32.mrb[0].mxu0
        %v2209 = vadd.f32 0.0, %v2208
        %v2210 = vpop.f32.mrb[0].mxu0
        %2211 = vdwg.mxu0
        %2212 = vrot.lane.b32.xlu0 %v1547, 96
        %v2213 = vpop.permute.xlu0 %2212
        %v2216 = vsel %vm475, %v1958, 0
        %v2219 = vsel %vm475, %v1959, 0
        %2221 = vmatprep.subr.mxu0 0.0
        %2222 = vmatpush1.msra.mxu0 %v2213
        %2223 = vmatprep.subr.mxu0 0.0
        %2224 = vmatpush1.msra.mxu0 0.0
        %2225 = vmatprep.subr.mxu0 0.0
        %2226 = vmatpush1.msra.mxu0 0.0
        %2227 = vmatprep.subr.mxu0 0.0
        %2228 = vmatpush1.msra.mxu0 0.0
        %2229 = vmatprep.subr.mxu0 0.0
        %2230 = vmatpush1.msra.mxu0 0.0
        %2231 = vmatprep.subr.mxu0 0.0
        %2232 = vmatpush1.msra.mxu0 0.0
        %2233 = vmatprep.subr.mxu0 0.0
        %2234 = vmatpush1.msra.mxu0 0.0
        %2235 = vmatprep.subr.mxu0 0.0
        %2236 = vmatpush1.msra.mxu0 0.0
        %2237 = vmatprep.subr.mxu0 0.0
        %2238 = vmatpush1.msra.mxu0 0.0
        %2239 = vmatprep.subr.mxu0 0.0
        %2240 = vmatpush1.msra.mxu0 0.0
        %2241 = vmatprep.subr.mxu0 0.0
        %2242 = vmatpush1.msra.mxu0 0.0
        %2243 = vmatprep.subr.mxu0 0.0
        %2244 = vmatpush1.msra.mxu0 0.0
        %2245 = vmatprep.subr.mxu0 0.0
        %2246 = vmatpush1.msra.mxu0 0.0
        %2247 = vmatprep.subr.mxu0 0.0
        %2248 = vmatpush1.msra.mxu0 0.0
        %2249 = vmatprep.subr.mxu0 0.0
        %2250 = vmatpush1.msra.mxu0 0.0
        %2251 = vmatprep.subr.mxu0 0.0
        %2252 = vmatpush1.msra.mxu0 0.0
        %2253 = vmatprep.subr.mxu0 0.0
        %2254 = vmatpush1.msra.mxu0 0.0
        %2255 = vmatprep.subr.mxu0 0.0
        %2256 = vmatpush1.msra.mxu0 0.0
        %2257 = vmatprep.subr.mxu0 0.0
        %2258 = vmatpush1.msra.mxu0 0.0
        %2259 = vmatprep.subr.mxu0 0.0
        %2260 = vmatpush1.msra.mxu0 0.0
        %2261 = vmatprep.subr.mxu0 0.0
        %2262 = vmatpush1.msra.mxu0 0.0
        %2263 = vmatprep.subr.mxu0 0.0
        %2264 = vmatpush1.msra.mxu0 0.0
        %2265 = vmatprep.subr.mxu0 0.0
        %2266 = vmatpush1.msra.mxu0 0.0
        %2267 = vmatprep.subr.mxu0 0.0
        %2268 = vmatpush1.msra.mxu0 0.0
        %2269 = vmatprep.subr.mxu0 0.0
        %2270 = vmatpush1.msra.mxu0 0.0
        %2271 = vmatprep.subr.mxu0 0.0
        %2272 = vmatpush1.msra.mxu0 0.0
        %2273 = vmatprep.subr.mxu0 0.0
        %2274 = vmatpush1.msra.mxu0 0.0
        %2275 = vmatprep.subr.mxu0 0.0
        %2276 = vmatpush1.msra.mxu0 0.0
        %2277 = vmatprep.subr.mxu0 0.0
        %2278 = vmatpush1.msra.mxu0 0.0
        %2279 = vmatprep.subr.mxu0 0.0
        %2280 = vmatpush1.msra.mxu0 0.0
        %2281 = vmatprep.subr.mxu0 0.0
        %2282 = vmatpush1.msra.mxu0 0.0
        %2283 = vmatprep.subr.mxu0 0.0
        %2284 = vmatpush1.msra.mxu0 0.0
        %2285 = vmatprep.mubr.f32.mxu0 0.0
        %2286 = vmatmul.mubr.f32.gmra.mrb[0].mxu0 %v2216
        %v2287 = vpop.f32.mrb[0].mxu0
        %v2288 = vadd.f32 0.0, %v2287
        %v2289 = vpop.f32.mrb[0].mxu0
        %2290 = vmatprep.mubr.f32.mxu0 0.0
        %2291 = vmatmul.mubr.f32.gmra.mrb[0].mxu0 %v2219
        %v2292 = vpop.f32.mrb[0].mxu0
        %v2293 = vadd.f32 0.0, %v2292
        %v2294 = vpop.f32.mrb[0].mxu0
        %2295 = vdwg.mxu0
        %v2296 = vadd.f32 %v1429, %v2036
        %v2297 = vadd.f32 %v1434, %v2041
        %v2298 = vadd.f32 %v1524, %v2120
        %v2299 = vadd.f32 %v1526, %v2125
        %v2300 = vadd.f32 %v1530, %v2204
        %v2301 = vadd.f32 %v1532, %v2209
        %v2302 = vadd.f32 %v1536, %v2288
        %v2303 = vadd.f32 %v1538, %v2293
        %2306 = vrot.lane.b32.xlu0 %v2298, 8
        %v2307 = vpop.permute.xlu0 %2306
        %2308 = vrot.lane.b32.xlu0 %v2299, 8
        %v2309 = vpop.permute.xlu0 %2308
        %2314 = vrot.lane.b32.xlu0 %v2300, 16
        %v2315 = vpop.permute.xlu0 %2314
        %2316 = vrot.lane.b32.xlu0 %v2301, 16
        %v2317 = vpop.permute.xlu0 %2316
        %2322 = vrot.lane.b32.xlu0 %v2302, 24
        %v2323 = vpop.permute.xlu0 %2322
        %2324 = vrot.lane.b32.xlu0 %v2303, 24
        %v2325 = vpop.permute.xlu0 %2324
        %v2328 = vsel %vm475, %v2296, %v2307
        %v2329 = vsel %vm475, %v2297, %v2309
        %v2330 = vsel %vm886, %v2328, %v2315
        %v2331 = vsel %vm886, %v2329, %v2317
        %v2332 = vsel %vm1265, %v2330, %v2323
        %v2333 = vsel %vm1265, %v2331, %v2325
        %v2334 = vld [vmem:[#allocation8] sm:$0xff]
        %v2335 = vld [vmem:[#allocation8 + $0x8] sm:$0xff]
        %v2336 = vld [vmem:[#allocation8 + $0x10] sm:$0xff]
        %v2337 = vld [vmem:[#allocation8 + $0x18] sm:$0xff]
        %v2338 = vld [vmem:[%s11] sm:$0x1]
        %v2340 = vlaneseq
        %v2341 = vshrl.u32 %v2340, 7
        %v2342 = vsub.s32 0, %v2341
        %v2343 = vrot.slane %v2338, %v2342
        %v2346 = vsel %vm1278, %v2332, 0
        %v2349 = vsel %vm1278, %v2333, 0
        %2351 = vmatprep.subr.mxu0 0.0
        %2352 = vmatpush1.msra.mxu0 %v2334
        %2353 = vmatprep.subr.mxu0 0.0
        %2354 = vmatpush1.msra.mxu0 %v2335
        %2355 = vmatprep.subr.mxu0 0.0
        %2356 = vmatpush1.msra.mxu0 %v2336
        %2357 = vmatprep.subr.mxu0 0.0
        %2358 = vmatpush1.msra.mxu0 %v2337
        %2359 = vmatprep.subr.mxu0 0.0
        %2360 = vmatpush1.msra.mxu0 0.0
        %2361 = vmatprep.subr.mxu0 0.0
        %2362 = vmatpush1.msra.mxu0 0.0
        %2363 = vmatprep.subr.mxu0 0.0
        %2364 = vmatpush1.msra.mxu0 0.0
        %2365 = vmatprep.subr.mxu0 0.0
        %2366 = vmatpush1.msra.mxu0 0.0
        %2367 = vmatprep.subr.mxu0 0.0
        %2368 = vmatpush1.msra.mxu0 0.0
        %2369 = vmatprep.subr.mxu0 0.0
        %2370 = vmatpush1.msra.mxu0 0.0
        %2371 = vmatprep.subr.mxu0 0.0
        %2372 = vmatpush1.msra.mxu0 0.0
        %2373 = vmatprep.subr.mxu0 0.0
        %2374 = vmatpush1.msra.mxu0 0.0
        %2375 = vmatprep.subr.mxu0 0.0
        %2376 = vmatpush1.msra.mxu0 0.0
        %2377 = vmatprep.subr.mxu0 0.0
        %2378 = vmatpush1.msra.mxu0 0.0
        %2379 = vmatprep.subr.mxu0 0.0
        %2380 = vmatpush1.msra.mxu0 0.0
        %2381 = vmatprep.subr.mxu0 0.0
        %2382 = vmatpush1.msra.mxu0 0.0
        %2383 = vmatprep.subr.mxu0 0.0
        %2384 = vmatpush1.msra.mxu0 0.0
        %2385 = vmatprep.subr.mxu0 0.0
        %2386 = vmatpush1.msra.mxu0 0.0
        %2387 = vmatprep.subr.mxu0 0.0
        %2388 = vmatpush1.msra.mxu0 0.0
        %2389 = vmatprep.subr.mxu0 0.0
        %2390 = vmatpush1.msra.mxu0 0.0
        %2391 = vmatprep.subr.mxu0 0.0
        %2392 = vmatpush1.msra.mxu0 0.0
        %2393 = vmatprep.subr.mxu0 0.0
        %2394 = vmatpush1.msra.mxu0 0.0
        %2395 = vmatprep.subr.mxu0 0.0
        %2396 = vmatpush1.msra.mxu0 0.0
        %2397 = vmatprep.subr.mxu0 0.0
        %2398 = vmatpush1.msra.mxu0 0.0
        %2399 = vmatprep.subr.mxu0 0.0
        %2400 = vmatpush1.msra.mxu0 0.0
        %2401 = vmatprep.subr.mxu0 0.0
        %2402 = vmatpush1.msra.mxu0 0.0
        %2403 = vmatprep.subr.mxu0 0.0
        %2404 = vmatpush1.msra.mxu0 0.0
        %2405 = vmatprep.subr.mxu0 0.0
        %2406 = vmatpush1.msra.mxu0 0.0
        %2407 = vmatprep.subr.mxu0 0.0
        %2408 = vmatpush1.msra.mxu0 0.0
        %2409 = vmatprep.subr.mxu0 0.0
        %2410 = vmatpush1.msra.mxu0 0.0
        %2411 = vmatprep.subr.mxu0 0.0
        %2412 = vmatpush1.msra.mxu0 0.0
        %2413 = vmatprep.subr.mxu0 0.0
        %2414 = vmatpush1.msra.mxu0 0.0
        %2415 = vmatprep.mubr.f32.mxu0 0.0
        %2416 = vmatmul.mubr.f32.gmra.mrb[0].mxu0 %v2346
        %v2417 = vpop.f32.mrb[0].mxu0
        %v2418 = vadd.f32 %v2343, %v2417
        %v2419 = vpop.f32.mrb[0].mxu0
        %2420 = vmatprep.mubr.f32.mxu0 0.0
        %2421 = vmatmul.mubr.f32.gmra.mrb[0].mxu0 %v2349
        %v2422 = vpop.f32.mrb[0].mxu0
        %v2423 = vadd.f32 %v2343, %v2422
        %v2424 = vpop.f32.mrb[0].mxu0
        %2425 = vdwg.mxu0
        %v2426 = vmax.f32 %v2418, 0.0
        %v2427 = vmax.f32 %v2423, 0.0
        %v2428 = vadd.f32 %v2332, %v2426
        %v2429 = vadd.f32 %v2333, %v2427
        %2430 = vst.msk [vmem:[%s459] sm:$0xff] %vm1278, %v2428
        %2431 = vst.msk [vmem:[%s459 + $0x8] sm:$0xff] %vm1278, %v2429
        %s2432 = sand.u32 %s294, 1
        %s2433 = scalar_lea.sflag [#allocation4], %s2432
        %s2434 = sand.u32 %s294, 1
        %s2435 = smul.addr %s2434, 16
        %s2436 = scalar_lea.vmem [#allocation10], %s2435
        // Predicated region
        $region85: #{tpu_custom_call.1} parent=67 // pred_check
          %p2437 = pneg %p304
        $region86: #{tpu_custom_call.1} parent=67 // pred_check_branch
          %2439 = sbr.rel (%p2437) target = $region88
        $region87: #{tpu_custom_call.1} parent=67 // pred_region
          %s2441 = ssub.s32 256, 256
          %2442 = vsyncadd %s2433, %s2441
          %s2443 = smul.addr %s29, 2
          %s2444 = smul.addr %s2443, 128
          %s2445 = scalar_lea.hbm %s12, %s2444
          %s2446 = sshll.u32 %s2436, 4
          %s2447 = int_to_ptr.vmem [resolvable:$true] %s2446
          %2452 = dma.vmem_to_hbm [thread:$0]  %s2447, 256, %s2445, %s2433, 128, 128, 8
        $region88: #{tpu_custom_call.1} parent=67 // pred_fallthru
          _
      $region68: #{tpu_custom_call.1} parent=5 // pred_fallthru
        _
      %p2453 = scmp.le.s32.totalorder 2, %s24
      // Predicated region
      $region89: #{tpu_custom_call.1} parent=5 // pred_check
        %p2454 = pneg %p2453
      $region90: #{tpu_custom_call.1} parent=5 // pred_check_branch
        %2456 = sbr.rel (%p2454) target = $region92
      $region91: #{tpu_custom_call.1} parent=5 // pred_region
        %s2457 = ssub.s32 %s24, 2
        // Predicated region
        $region93: #{tpu_custom_call.1} parent=91 // pred_check
          %p2458 = pneg %p310
        $region94: #{tpu_custom_call.1} parent=91 // pred_check_branch
          %2460 = sbr.rel (%p2458) target = $region96
        $region95: #{tpu_custom_call.1} parent=91 // pred_region
          %s2461 = sand.u32 %s295, 1
          %s2462 = scalar_lea.sflag [#allocation4], %s2461
          %s2463 = sand.u32 %s295, 1
          %s2464 = smul.addr %s2463, 16
          %s2465 = scalar_lea.vmem [#allocation10], %s2464
          %2466 = dma.done %s2462, 256
        $region96: #{tpu_custom_call.1} parent=91 // pred_fallthru
          _
      $region92: #{tpu_custom_call.1} parent=5 // pred_fallthru
        _
    $region6: #{tpu_custom_call.1} parent=1 // loop_footer
      %s28 = sadd.s32 1, %s24
    $region7: #{tpu_custom_call.1} parent=1 // loop_footer_branch
      %23 = sbr.rel target = $region3
    $region8: #{tpu_custom_call.1} parent=1 // loop_exit
      _
    %2467 = vsyncpa [#allocation3], 1
    %s2468 = scalar_lea.sflag [#allocation3], 1
    %2469 = vsyncpa %s2468, 1
    %2470 = vsyncpa [#allocation6], 1
    %2471 = vsyncpa [#allocation9], 1
    %2472 = vsyncpa [#allocation4], 1
    %s2473 = scalar_lea.sflag [#allocation4], 1
    %2474 = vsyncpa %s2473, 1

</llo_original>
